<compile_context>
chip_gen: v7x
topology: tpu7x:2x2x1
jax: 0.10.0
libtpu: 0.0.40
codegen_flags: <defaults>
</compile_context>

<pallas_src>
import jax
import jax.numpy as jnp
from jax.experimental import pallas as pl
from jax.experimental.pallas import tpu as pltpu

PAD_ID = -1
SEQ_NEW_EQN_ID = 1
SEQ_END_EQN_ID = 2


# ----------------------------------------------------------------------------
# Fused kernel: encoder self-attn -> decoder cross-attn -> logits -> loss stats
# One grid step == one block of Bp batch elements (Bp = B // NCORES).
# Output is one lane-dense [1, 128] row of partial sums per grid step:
# lane0=sum_nll, lane1=n_valid, lane2=n_correct, lane3=sum_seq_ok.
# ----------------------------------------------------------------------------
def _fused_kernel(emb_ref, negmask_ref, eqemb_ref, tgt_ref,
                  enc_wq_ref, enc_wk_ref, enc_wv_ref, enc_wo_ref,
                  dec_wq_ref, dec_wd_ref, dec_wc_ref, dec_wout_ref,
                  logit_bias_ref, out_ref):
    Bp, S, H = emb_ref.shape
    Tm = eqemb_ref.shape[1]
    Vp = dec_wout_ref.shape[1]
    scale = 1.0 / float(H) ** 0.5
    f32 = jnp.float32
    bf16 = jnp.bfloat16

    h = emb_ref[...]                                   # [Bp,S,H]  f32
    negmask = negmask_ref[...]                         # [Bp,1,S]  (pad * -1e9)
    h2 = h.reshape(Bp * S, H)                          # flat slab for projections
    h2b = h2.astype(bf16)

    # ---- text encoder: three lane-aligned [H,H] projections (bf16 MXU) ----
    q = jnp.dot(h2b, enc_wq_ref[...], preferred_element_type=f32).reshape(Bp, S, H)
    k = jnp.dot(h2b, enc_wk_ref[...], preferred_element_type=f32).reshape(Bp, S, H)
    v = jnp.dot(h2b, enc_wv_ref[...], preferred_element_type=f32).reshape(Bp, S, H)

    # scores contract on H directly (no k.T / XLU transpose)
    s = jnp.einsum('bqh,bkh->bqk', q.astype(bf16), k.astype(bf16),
                   preferred_element_type=f32) * scale + negmask    # [Bp,S,S]
    s = s - jnp.max(s, axis=-1, keepdims=True)
    p = jnp.exp(s)
    p = p * pl.reciprocal(jnp.sum(p, axis=-1, keepdims=True), approx=True)
    ctx = jnp.einsum('bqk,bkh->bqh', p.astype(bf16), v.astype(bf16),
                     preferred_element_type=f32)                    # [Bp,S,H]
    enc = jnp.tanh(jnp.dot(ctx.reshape(Bp * S, H).astype(bf16), enc_wo_ref[...],
                           preferred_element_type=f32) + h2)        # [Bp*S,H] f32
    encb = enc.reshape(Bp, S, H).astype(bf16)

    # ---- op decoder: cross-attention over encoder states ----
    e2 = eqemb_ref[...].reshape(Bp * Tm, H)            # [Bp*Tm,H]
    e2b = e2.astype(bf16)
    dq = jnp.dot(e2b, dec_wq_ref[...], preferred_element_type=f32)  # [Bp*Tm,H]
    ed = jnp.dot(e2b, dec_wd_ref[...], preferred_element_type=f32)  # [Bp*Tm,H]

    ds = jnp.einsum('bqh,bkh->bqk', dq.reshape(Bp, Tm, H).astype(bf16), encb,
                    preferred_element_type=f32) * scale + negmask   # [Bp,Tm,S]
    ds = ds - jnp.max(ds, axis=-1, keepdims=True)
    dp = jnp.exp(ds)
    dp = dp * pl.reciprocal(jnp.sum(dp, axis=-1, keepdims=True), approx=True)
    dctx = jnp.einsum('bqk,bkh->bqh', dp.astype(bf16), encb,
                      preferred_element_type=f32)                   # [Bp,Tm,H]

    d = jnp.tanh(ed + jnp.dot(dctx.reshape(Bp * Tm, H).astype(bf16), dec_wc_ref[...],
                              preferred_element_type=f32))          # [Bp*Tm,H] f32
    # lane-dense padded logits; pad classes pushed to -1e9 by the additive bias
    logits = (jnp.dot(d.astype(bf16), dec_wout_ref[...],
                      preferred_element_type=f32)
              + logit_bias_ref[...])                                # [Bp*Tm,Vp] f32

    # ---- teacher-forcing cross-entropy + token/seq accuracy (exact f32) ----
    tgt = tgt_ref[...].reshape(Bp * Tm, 1)                          # int32
    m = jnp.max(logits, axis=-1, keepdims=True)                     # [Bp*Tm,1]
    sumexp = jnp.sum(jnp.exp(logits - m), axis=-1, keepdims=True)
    lse = jnp.log(sumexp) + m

    iota_v = jax.lax.broadcasted_iota(jnp.int32, logits.shape, 1)   # [Bp*Tm,Vp]
    onehot = iota_v == tgt
    tgt_logit = jnp.sum(jnp.where(onehot, logits, 0.0), axis=-1, keepdims=True)
    nll = lse - tgt_logit                                           # [Bp*Tm,1]
    valid = (tgt != PAD_ID).astype(f32)                             # [Bp*Tm,1]

    # argmax via first-index-of-max (pad lanes are -1e9, never selected)
    idx = jnp.where(logits == m, iota_v, Vp)
    pred = jnp.min(idx, axis=-1, keepdims=True)
    correct = (pred == tgt).astype(f32) * valid

    sum_nll = jnp.sum(nll * valid)
    n_valid = jnp.sum(valid)
    n_correct = jnp.sum(correct)
    # per-sequence accuracy (all-PAD sequence counts as correct, as before)
    mismatch_b = jnp.sum((valid - correct).reshape(Bp, Tm, 1), axis=1, keepdims=True)
    seq_ok = jnp.sum((mismatch_b == 0.0).astype(f32))

    # single nested-select lane-pack (one [1,128] store)
    lane = jax.lax.broadcasted_iota(jnp.int32, (1, 128), 1)
    out_ref[0] = jnp.where(lane == 0, sum_nll,
                 jnp.where(lane == 1, n_valid,
                 jnp.where(lane == 2, n_correct,
                 jnp.where(lane == 3, seq_ok, 0.0))))


def fused_forward(emb, negmask, eq_emb, tgt3,
                  enc_wq, enc_wk, enc_wv, enc_wo,
                  dec_wq, dec_wd, dec_wc, dec_wout_pad, logit_bias):
    B, S, H = emb.shape
    Tm = eq_emb.shape[1]
    Vp = dec_wout_pad.shape[1]
    # whole batch in one step; 2-way "parallel" split on even batches (v7x 2 TCs)
    ncores = 2 if (B >= 2 and B % 2 == 0) else 1
    Bp = B // ncores
    wmap = lambda c: (0, 0)
    return pl.pallas_call(
        _fused_kernel,
        out_shape=jax.ShapeDtypeStruct((ncores, 1, 128), jnp.float32),
        grid=(ncores,),
        in_specs=[
            pl.BlockSpec((Bp, S, H), lambda c: (c, 0, 0)),     # emb
            pl.BlockSpec((Bp, 1, S), lambda c: (c, 0, 0)),     # negmask
            pl.BlockSpec((Bp, Tm, H), lambda c: (c, 0, 0)),    # eq_emb
            pl.BlockSpec((Bp, Tm, 1), lambda c: (c, 0, 0)),    # targets
            pl.BlockSpec((H, H), wmap),                        # enc Wq
            pl.BlockSpec((H, H), wmap),                        # enc Wk
            pl.BlockSpec((H, H), wmap),                        # enc Wv
            pl.BlockSpec((H, H), wmap),                        # enc Wo
            pl.BlockSpec((H, H), wmap),                        # dec Wq
            pl.BlockSpec((H, H), wmap),                        # dec Wd
            pl.BlockSpec((H, H), wmap),                        # dec Wc
            pl.BlockSpec((H, Vp), wmap),                       # dec Wout (padded)
            pl.BlockSpec((1, Vp), wmap),                       # logit pad bias
        ],
        out_specs=pl.BlockSpec((1, 1, 128), lambda c: (c, 0, 0)),
        compiler_params=pltpu.CompilerParams(dimension_semantics=("parallel",)),
    )(emb, negmask, eq_emb, tgt3, enc_wq, enc_wk, enc_wv, enc_wo,
      dec_wq, dec_wd, dec_wc, dec_wout_pad, logit_bias)


# ----------------------------------------------------------------------------
# Solver wrapper (plain-JAX glue: embedding lookups, weight setup)
# ----------------------------------------------------------------------------
class Solver:
    """JAX/Pallas re-implementation of Solver._forward_training (op-type decoder)."""

    def __init__(self, vocab_text=64, vocab_op=20, hidden=32, seed=0):
        self.hidden = hidden
        self.vocab_op = vocab_op
        key = jax.random.PRNGKey(seed)
        ks = jax.random.split(key, 9)
        scale = 0.02
        H = hidden
        self.emb_text = scale * jax.random.normal(ks[0], (vocab_text, H), jnp.float32)
        self.emb_num = scale * jax.random.normal(ks[1], (H,), jnp.float32)
        enc_wq = scale * jax.random.normal(ks[2], (H, H), jnp.float32)
        enc_wk = scale * jax.random.normal(ks[3], (H, H), jnp.float32)
        enc_wv = scale * jax.random.normal(ks[4], (H, H), jnp.float32)
        enc_wo = scale * jax.random.normal(ks[5], (H, H), jnp.float32)
        self.emb_op = scale * jax.random.normal(ks[6], (vocab_op, H), jnp.float32)
        k7 = jax.random.split(ks[7], 3)
        dec_wq = scale * jax.random.normal(k7[0], (H, H), jnp.float32)
        dec_wc = scale * jax.random.normal(k7[1], (H, H), jnp.float32)
        dec_wd = scale * jax.random.normal(k7[2], (H, H), jnp.float32)
        dec_wout = scale * jax.random.normal(ks[8], (H, vocab_op), jnp.float32)

        # ---- MXU weights kept separate (lane-aligned), stored once in bf16 ----
        self.enc_wq = enc_wq.astype(jnp.bfloat16)
        self.enc_wk = enc_wk.astype(jnp.bfloat16)
        self.enc_wv = enc_wv.astype(jnp.bfloat16)
        self.enc_wo = enc_wo.astype(jnp.bfloat16)
        self.dec_wq = dec_wq.astype(jnp.bfloat16)
        self.dec_wd = dec_wd.astype(jnp.bfloat16)
        self.dec_wc = dec_wc.astype(jnp.bfloat16)
        self.v_pad = ((vocab_op + 127) // 128) * 128
        wout_pad = jnp.zeros((H, self.v_pad), jnp.float32)
        wout_pad = wout_pad.at[:, :vocab_op].set(dec_wout)
        self.dec_wout_pad = wout_pad.astype(jnp.bfloat16)            # [H,Vp]
        self.logit_bias = jnp.where(jnp.arange(self.v_pad) < vocab_op,
                                    0.0, -1e9).astype(jnp.float32)[None, :]  # [1,Vp]

    @property
    def required_field(self):
        return "op"

    @property
    def is_expression_type(self):
        return False

    def _forward_training(self, text, text_pad, text_num, equation):
        B = text.shape[0]
        # --- TextModel front-end: embedding + number-position embedding ---
        emb = jnp.take(self.emb_text, jnp.maximum(text, 0), axis=0)           # [B,S,H]
        emb = emb + text_num.astype(jnp.float32)[..., None] * self.emb_num[None, None, :]
        # precomputed additive key-padding mask (hoisted out of the kernel body)
        negmask = text_pad.astype(jnp.float32)[:, None, :] * (-1e9)           # [B,1,S]

        # --- DecoderModel (op type, teacher forcing): shift-by-one prediction ---
        eq_tok = equation[..., 0]                                             # [B,T]
        dec_in = eq_tok[:, :-1]                                               # [B,T-1]
        targets = eq_tok[:, 1:].astype(jnp.int32)[..., None]                  # [B,T-1,1]
        eq_emb = jnp.take(self.emb_op, jnp.maximum(dec_in, 0), axis=0)        # [B,T-1,H]

        # --- single fused Pallas kernel: encoder + decoder + batch loss stats ---
        stats = fused_forward(emb, negmask, eq_emb, targets,
                              self.enc_wq, self.enc_wk, self.enc_wv, self.enc_wo,
                              self.dec_wq, self.dec_wd, self.dec_wc,
                              self.dec_wout_pad, self.logit_bias)   # [ncores,1,128]

        # tiny scalar finalize (sum over <=2 core rows + 3 divides)
        sums = jnp.sum(stats[:, 0, :4], axis=0)                               # [4]
        denom = jnp.maximum(sums[1], 1.0)
        loss = sums[0] / denom
        acc_tok = sums[2] / denom
        acc_seq = sums[3] / jnp.float32(B)

        result = {
            "Train_op/loss": loss,
            "Train_op/acc_token": acc_tok,
            "Train_op/acc_seq": acc_seq,
        }
        total = jnp.float32(0.0)
        for k, v in result.items():
            if k.endswith("/loss"):
                total = total + v
        result["total_loss"] = total
        return result

    def forward(self, training=True, **kwargs):
        if training:
            return self._forward_training(**kwargs)
        # TODO(synk): auto-regressive beam search (_forward_testing) is host-side
        #             control flow and is not translated to Pallas.
        raise NotImplementedError("Only the training (teacher-forcing) path is implemented.")


if __name__ == "__main__":
    B, S, T, H = 2, 16, 8, 32
    V_TXT, V_OP = 64, 20

    key = jax.random.PRNGKey(0)
    k_text, k_eq = jax.random.split(key, 2)

    # text indices [B,S], padding mask, number-position mask
    text = jax.random.randint(k_text, (B, S), 3, V_TXT, dtype=jnp.int32)
    text_pad = jnp.zeros((B, S), dtype=bool).at[:, S - 3:].set(True)
    text_num = jnp.zeros((B, S), dtype=bool).at[:, 2].set(True).at[:, 5].set(True)

    # op-token equation [B, T, 2]: channel 0 = token id, channel 1 = aux field
    body = jax.random.randint(k_eq, (B, T), 3, V_OP, dtype=jnp.int32)
    eq_tok = body.at[:, 0].set(SEQ_NEW_EQN_ID)
    eq_tok = eq_tok.at[:, T - 2].set(SEQ_END_EQN_ID)
    eq_tok = eq_tok.at[:, T - 1].set(PAD_ID)           # padded tail
    equation = jnp.stack([eq_tok, jnp.zeros_like(eq_tok)], axis=-1)  # [B,T,2]

    solver = Solver(vocab_text=V_TXT, vocab_op=V_OP, hidden=H, seed=0)
    result = solver.forward(training=True, text=text, text_pad=text_pad,
                            text_num=text_num, equation=equation)

    jax.block_until_ready(result["total_loss"])
    print("KERNEL_OK")
</pallas_src>

<mosaic_0001>
module attributes {stable_mosaic.version = 11 : i64} {
  func.func @_fused_kernel(%arg0: i32, %arg1: memref<1x16x32xf32, #tpu.memory_space<vmem>>, %arg2: memref<1x1x16xf32, #tpu.memory_space<vmem>>, %arg3: memref<1x7x32xf32, #tpu.memory_space<vmem>>, %arg4: memref<1x7x1xi32, #tpu.memory_space<vmem>>, %arg5: memref<32x32xbf16, #tpu.memory_space<vmem>>, %arg6: memref<32x32xbf16, #tpu.memory_space<vmem>>, %arg7: memref<32x32xbf16, #tpu.memory_space<vmem>>, %arg8: memref<32x32xbf16, #tpu.memory_space<vmem>>, %arg9: memref<32x32xbf16, #tpu.memory_space<vmem>>, %arg10: memref<32x32xbf16, #tpu.memory_space<vmem>>, %arg11: memref<32x32xbf16, #tpu.memory_space<vmem>>, %arg12: memref<32x128xbf16, #tpu.memory_space<vmem>>, %arg13: memref<1x128xf32, #tpu.memory_space<vmem>>, %arg14: memref<1x1x128xf32, #tpu.memory_space<vmem>>) attributes {dimension_semantics = [#tpu.dimension_semantics<parallel>], iteration_bounds = array<i64: 2>, scalar_prefetch = 0 : i64, scratch_operands = 0 : i64, tpu.core_type = #tpu.core_type<tc>, window_params = [{transform_indices = @transform_0, window_bounds = array<i64: 1, 16, 32>}, {transform_indices = @transform_1, window_bounds = array<i64: 1, 1, 16>}, {transform_indices = @transform_2, window_bounds = array<i64: 1, 7, 32>}, {transform_indices = @transform_3, window_bounds = array<i64: 1, 7, 1>}, {pipeline_mode = #tpu.pipeline_mode<synchronous>, transform_indices = @transform_4, window_bounds = array<i64: 32, 32>}, {pipeline_mode = #tpu.pipeline_mode<synchronous>, transform_indices = @transform_5, window_bounds = array<i64: 32, 32>}, {pipeline_mode = #tpu.pipeline_mode<synchronous>, transform_indices = @transform_6, window_bounds = array<i64: 32, 32>}, {pipeline_mode = #tpu.pipeline_mode<synchronous>, transform_indices = @transform_7, window_bounds = array<i64: 32, 32>}, {pipeline_mode = #tpu.pipeline_mode<synchronous>, transform_indices = @transform_8, window_bounds = array<i64: 32, 32>}, {pipeline_mode = #tpu.pipeline_mode<synchronous>, transform_indices = @transform_9, window_bounds = array<i64: 32, 32>}, {pipeline_mode = #tpu.pipeline_mode<synchronous>, transform_indices = @transform_10, window_bounds = array<i64: 32, 32>}, {pipeline_mode = #tpu.pipeline_mode<synchronous>, transform_indices = @transform_11, window_bounds = array<i64: 32, 128>}, {pipeline_mode = #tpu.pipeline_mode<synchronous>, transform_indices = @transform_12, window_bounds = array<i64: 1, 128>}, {transform_indices = @transform_13, window_bounds = array<i64: 1, 1, 128>}]} {
    %c0 = arith.constant 0 : index
    %c0_0 = arith.constant 0 : index
    %c0_1 = arith.constant 0 : index
    %0 = vector.load %arg1[%c0, %c0_0, %c0_1] : memref<1x16x32xf32, #tpu.memory_space<vmem>>, vector<1x16x32xf32>
    %c0_2 = arith.constant 0 : index
    %c0_3 = arith.constant 0 : index
    %c0_4 = arith.constant 0 : index
    %1 = vector.load %arg2[%c0_2, %c0_3, %c0_4] : memref<1x1x16xf32, #tpu.memory_space<vmem>>, vector<1x1x16xf32>
    %2 = vector.shape_cast %0 : vector<1x16x32xf32> to vector<16x32xf32>
    %3 = arith.truncf %2 : vector<16x32xf32> to vector<16x32xbf16>
    %c0_5 = arith.constant 0 : index
    %c0_6 = arith.constant 0 : index
    %4 = vector.load %arg5[%c0_5, %c0_6] : memref<32x32xbf16, #tpu.memory_space<vmem>>, vector<32x32xbf16>
    %cst = arith.constant dense<0.000000e+00> : vector<16x32xf32>
    %5 = tpu.matmul %3, %4, %cst {dimension_numbers = #tpu.dot_dimension_numbers<[1], [0], [0], [1], [0, 0, 1, 1], [], []>} : vector<16x32xbf16>, vector<32x32xbf16>, vector<16x32xf32> -> vector<16x32xf32>
    %6 = vector.shape_cast %5 : vector<16x32xf32> to vector<1x16x32xf32>
    %c0_7 = arith.constant 0 : index
    %c0_8 = arith.constant 0 : index
    %7 = vector.load %arg6[%c0_7, %c0_8] : memref<32x32xbf16, #tpu.memory_space<vmem>>, vector<32x32xbf16>
    %cst_9 = arith.constant dense<0.000000e+00> : vector<16x32xf32>
    %8 = tpu.matmul %3, %7, %cst_9 {dimension_numbers = #tpu.dot_dimension_numbers<[1], [0], [0], [1], [0, 0, 1, 1], [], []>} : vector<16x32xbf16>, vector<32x32xbf16>, vector<16x32xf32> -> vector<16x32xf32>
    %9 = vector.shape_cast %8 : vector<16x32xf32> to vector<1x16x32xf32>
    %c0_10 = arith.constant 0 : index
    %c0_11 = arith.constant 0 : index
    %10 = vector.load %arg7[%c0_10, %c0_11] : memref<32x32xbf16, #tpu.memory_space<vmem>>, vector<32x32xbf16>
    %cst_12 = arith.constant dense<0.000000e+00> : vector<16x32xf32>
    %11 = tpu.matmul %3, %10, %cst_12 {dimension_numbers = #tpu.dot_dimension_numbers<[1], [0], [0], [1], [0, 0, 1, 1], [], []>} : vector<16x32xbf16>, vector<32x32xbf16>, vector<16x32xf32> -> vector<16x32xf32>
    %12 = vector.shape_cast %11 : vector<16x32xf32> to vector<1x16x32xf32>
    %13 = arith.truncf %6 : vector<1x16x32xf32> to vector<1x16x32xbf16>
    %14 = arith.truncf %9 : vector<1x16x32xf32> to vector<1x16x32xbf16>
    "tpu.trace_start"() <{level = 10 : i32, message = "bqh,bkh->bqk"}> : () -> ()
    %cst_13 = arith.constant dense<0.000000e+00> : vector<1x16x16xf32>
    %15 = tpu.matmul %13, %14, %cst_13 {dimension_numbers = #tpu.dot_dimension_numbers<[2], [2], [1], [1], [0, 0, 0, 1, 1, 1], [0], [0]>} : vector<1x16x32xbf16>, vector<1x16x32xbf16>, vector<1x16x16xf32> -> vector<1x16x16xf32>
    "tpu.trace_stop"() : () -> ()
    %cst_14 = arith.constant 0.176776692 : f32
    %16 = vector.broadcast %cst_14 : f32 to vector<1x16x16xf32>
    %17 = arith.mulf %15, %16 : vector<1x16x16xf32>
    %18 = vector.broadcast %1 : vector<1x1x16xf32> to vector<1x16x16xf32>
    %19 = arith.addf %17, %18 : vector<1x16x16xf32>
    %cst_15 = arith.constant dense<0xFF800000> : vector<1x16xf32>
    %20 = vector.multi_reduction <maximumf>, %19, %cst_15 [2] : vector<1x16x16xf32> to vector<1x16xf32>
    %21 = vector.shape_cast %20 : vector<1x16xf32> to vector<1x16x1xf32>
    %22 = vector.broadcast %21 : vector<1x16x1xf32> to vector<1x16x16xf32>
    %23 = arith.subf %19, %22 : vector<1x16x16xf32>
    %24 = math.exp %23 : vector<1x16x16xf32>
    %cst_16 = arith.constant dense<0.000000e+00> : vector<1x16xf32>
    %25 = vector.multi_reduction <add>, %24, %cst_16 [2] : vector<1x16x16xf32> to vector<1x16xf32>
    %26 = vector.shape_cast %25 : vector<1x16xf32> to vector<1x16x1xf32>
    %27 = tpu.reciprocal %26 {approx = true} : vector<1x16x1xf32> -> vector<1x16x1xf32>
    %28 = vector.broadcast %27 : vector<1x16x1xf32> to vector<1x16x16xf32>
    %29 = arith.mulf %24, %28 : vector<1x16x16xf32>
    %30 = arith.truncf %29 : vector<1x16x16xf32> to vector<1x16x16xbf16>
    %31 = arith.truncf %12 : vector<1x16x32xf32> to vector<1x16x32xbf16>
    "tpu.trace_start"() <{level = 10 : i32, message = "bqk,bkh->bqh"}> : () -> ()
    %cst_17 = arith.constant dense<0.000000e+00> : vector<1x16x32xf32>
    %32 = tpu.matmul %30, %31, %cst_17 {dimension_numbers = #tpu.dot_dimension_numbers<[2], [1], [1], [2], [0, 0, 0, 1, 1, 2], [0], [0]>} : vector<1x16x16xbf16>, vector<1x16x32xbf16>, vector<1x16x32xf32> -> vector<1x16x32xf32>
    "tpu.trace_stop"() : () -> ()
    %33 = vector.shape_cast %32 : vector<1x16x32xf32> to vector<16x32xf32>
    %34 = arith.truncf %33 : vector<16x32xf32> to vector<16x32xbf16>
    %c0_18 = arith.constant 0 : index
    %c0_19 = arith.constant 0 : index
    %35 = vector.load %arg8[%c0_18, %c0_19] : memref<32x32xbf16, #tpu.memory_space<vmem>>, vector<32x32xbf16>
    %cst_20 = arith.constant dense<0.000000e+00> : vector<16x32xf32>
    %36 = tpu.matmul %34, %35, %cst_20 {dimension_numbers = #tpu.dot_dimension_numbers<[1], [0], [0], [1], [0, 0, 1, 1], [], []>} : vector<16x32xbf16>, vector<32x32xbf16>, vector<16x32xf32> -> vector<16x32xf32>
    %37 = arith.addf %36, %2 : vector<16x32xf32>
    %38 = math.tanh %37 : vector<16x32xf32>
    %39 = vector.shape_cast %38 : vector<16x32xf32> to vector<1x16x32xf32>
    %40 = arith.truncf %39 : vector<1x16x32xf32> to vector<1x16x32xbf16>
    %c0_21 = arith.constant 0 : index
    %c0_22 = arith.constant 0 : index
    %c0_23 = arith.constant 0 : index
    %41 = vector.load %arg3[%c0_21, %c0_22, %c0_23] : memref<1x7x32xf32, #tpu.memory_space<vmem>>, vector<1x7x32xf32>
    %42 = vector.shape_cast %41 : vector<1x7x32xf32> to vector<7x32xf32>
    %43 = arith.truncf %42 : vector<7x32xf32> to vector<7x32xbf16>
    %c0_24 = arith.constant 0 : index
    %c0_25 = arith.constant 0 : index
    %44 = vector.load %arg9[%c0_24, %c0_25] : memref<32x32xbf16, #tpu.memory_space<vmem>>, vector<32x32xbf16>
    %cst_26 = arith.constant dense<0.000000e+00> : vector<7x32xf32>
    %45 = tpu.matmul %43, %44, %cst_26 {dimension_numbers = #tpu.dot_dimension_numbers<[1], [0], [0], [1], [0, 0, 1, 1], [], []>} : vector<7x32xbf16>, vector<32x32xbf16>, vector<7x32xf32> -> vector<7x32xf32>
    %c0_27 = arith.constant 0 : index
    %c0_28 = arith.constant 0 : index
    %46 = vector.load %arg10[%c0_27, %c0_28] : memref<32x32xbf16, #tpu.memory_space<vmem>>, vector<32x32xbf16>
    %cst_29 = arith.constant dense<0.000000e+00> : vector<7x32xf32>
    %47 = tpu.matmul %43, %46, %cst_29 {dimension_numbers = #tpu.dot_dimension_numbers<[1], [0], [0], [1], [0, 0, 1, 1], [], []>} : vector<7x32xbf16>, vector<32x32xbf16>, vector<7x32xf32> -> vector<7x32xf32>
    %48 = vector.shape_cast %45 : vector<7x32xf32> to vector<1x7x32xf32>
    %49 = arith.truncf %48 : vector<1x7x32xf32> to vector<1x7x32xbf16>
    "tpu.trace_start"() <{level = 10 : i32, message = "bqh,bkh->bqk"}> : () -> ()
    %cst_30 = arith.constant dense<0.000000e+00> : vector<1x7x16xf32>
    %50 = tpu.matmul %49, %40, %cst_30 {dimension_numbers = #tpu.dot_dimension_numbers<[2], [2], [1], [1], [0, 0, 0, 1, 1, 1], [0], [0]>} : vector<1x7x32xbf16>, vector<1x16x32xbf16>, vector<1x7x16xf32> -> vector<1x7x16xf32>
    "tpu.trace_stop"() : () -> ()
    %cst_31 = arith.constant 0.176776692 : f32
    %51 = vector.broadcast %cst_31 : f32 to vector<1x7x16xf32>
    %52 = arith.mulf %50, %51 : vector<1x7x16xf32>
    %53 = vector.broadcast %1 : vector<1x1x16xf32> to vector<1x7x16xf32>
    %54 = arith.addf %52, %53 : vector<1x7x16xf32>
    %cst_32 = arith.constant dense<0xFF800000> : vector<1x7xf32>
    %55 = vector.multi_reduction <maximumf>, %54, %cst_32 [2] : vector<1x7x16xf32> to vector<1x7xf32>
    %56 = vector.shape_cast %55 : vector<1x7xf32> to vector<1x7x1xf32>
    %57 = vector.broadcast %56 : vector<1x7x1xf32> to vector<1x7x16xf32>
    %58 = arith.subf %54, %57 : vector<1x7x16xf32>
    %59 = math.exp %58 : vector<1x7x16xf32>
    %cst_33 = arith.constant dense<0.000000e+00> : vector<1x7xf32>
    %60 = vector.multi_reduction <add>, %59, %cst_33 [2] : vector<1x7x16xf32> to vector<1x7xf32>
    %61 = vector.shape_cast %60 : vector<1x7xf32> to vector<1x7x1xf32>
    %62 = tpu.reciprocal %61 {approx = true} : vector<1x7x1xf32> -> vector<1x7x1xf32>
    %63 = vector.broadcast %62 : vector<1x7x1xf32> to vector<1x7x16xf32>
    %64 = arith.mulf %59, %63 : vector<1x7x16xf32>
    %65 = arith.truncf %64 : vector<1x7x16xf32> to vector<1x7x16xbf16>
    "tpu.trace_start"() <{level = 10 : i32, message = "bqk,bkh->bqh"}> : () -> ()
    %cst_34 = arith.constant dense<0.000000e+00> : vector<1x7x32xf32>
    %66 = tpu.matmul %65, %40, %cst_34 {dimension_numbers = #tpu.dot_dimension_numbers<[2], [1], [1], [2], [0, 0, 0, 1, 1, 2], [0], [0]>} : vector<1x7x16xbf16>, vector<1x16x32xbf16>, vector<1x7x32xf32> -> vector<1x7x32xf32>
    "tpu.trace_stop"() : () -> ()
    %67 = vector.shape_cast %66 : vector<1x7x32xf32> to vector<7x32xf32>
    %68 = arith.truncf %67 : vector<7x32xf32> to vector<7x32xbf16>
    %c0_35 = arith.constant 0 : index
    %c0_36 = arith.constant 0 : index
    %69 = vector.load %arg11[%c0_35, %c0_36] : memref<32x32xbf16, #tpu.memory_space<vmem>>, vector<32x32xbf16>
    %cst_37 = arith.constant dense<0.000000e+00> : vector<7x32xf32>
    %70 = tpu.matmul %68, %69, %cst_37 {dimension_numbers = #tpu.dot_dimension_numbers<[1], [0], [0], [1], [0, 0, 1, 1], [], []>} : vector<7x32xbf16>, vector<32x32xbf16>, vector<7x32xf32> -> vector<7x32xf32>
    %71 = arith.addf %47, %70 : vector<7x32xf32>
    %72 = math.tanh %71 : vector<7x32xf32>
    %73 = arith.truncf %72 : vector<7x32xf32> to vector<7x32xbf16>
    %c0_38 = arith.constant 0 : index
    %c0_39 = arith.constant 0 : index
    %74 = vector.load %arg12[%c0_38, %c0_39] : memref<32x128xbf16, #tpu.memory_space<vmem>>, vector<32x128xbf16>
    %cst_40 = arith.constant dense<0.000000e+00> : vector<7x128xf32>
    %75 = tpu.matmul %73, %74, %cst_40 {dimension_numbers = #tpu.dot_dimension_numbers<[1], [0], [0], [1], [0, 0, 1, 1], [], []>} : vector<7x32xbf16>, vector<32x128xbf16>, vector<7x128xf32> -> vector<7x128xf32>
    %c0_41 = arith.constant 0 : index
    %c0_42 = arith.constant 0 : index
    %76 = vector.load %arg13[%c0_41, %c0_42] : memref<1x128xf32, #tpu.memory_space<vmem>>, vector<1x128xf32>
    %77 = vector.broadcast %76 : vector<1x128xf32> to vector<7x128xf32>
    %78 = arith.addf %75, %77 : vector<7x128xf32>
    %c0_43 = arith.constant 0 : index
    %c0_44 = arith.constant 0 : index
    %c0_45 = arith.constant 0 : index
    %79 = vector.load %arg4[%c0_43, %c0_44, %c0_45] : memref<1x7x1xi32, #tpu.memory_space<vmem>>, vector<1x7x1xi32>
    %80 = vector.shape_cast %79 : vector<1x7x1xi32> to vector<7x1xi32>
    %cst_46 = arith.constant dense<0xFF800000> : vector<7xf32>
    %81 = vector.multi_reduction <maximumf>, %78, %cst_46 [1] : vector<7x128xf32> to vector<7xf32>
    %82 = vector.shape_cast %81 : vector<7xf32> to vector<7x1xf32>
    %83 = vector.broadcast %82 : vector<7x1xf32> to vector<7x128xf32>
    %84 = arith.subf %78, %83 : vector<7x128xf32>
    %85 = math.exp %84 : vector<7x128xf32>
    %cst_47 = arith.constant dense<0.000000e+00> : vector<7xf32>
    %86 = vector.multi_reduction <add>, %85, %cst_47 [1] : vector<7x128xf32> to vector<7xf32>
    %87 = vector.shape_cast %86 : vector<7xf32> to vector<7x1xf32>
    %88 = math.log %87 : vector<7x1xf32>
    %89 = arith.addf %88, %82 : vector<7x1xf32>
    %90 = tpu.iota {dimensions = array<i32: 1>} : vector<7x128xi32>
    %91 = vector.broadcast %80 : vector<7x1xi32> to vector<7x128xi32>
    %92 = arith.cmpi eq, %90, %91 : vector<7x128xi32>
    %cst_48 = arith.constant 0.000000e+00 : f32
    %93 = vector.broadcast %cst_48 : f32 to vector<7x128xf32>
    %94 = arith.select %92, %78, %93 : vector<7x128xi1>, vector<7x128xf32>
    %cst_49 = arith.constant dense<0.000000e+00> : vector<7xf32>
    %95 = vector.multi_reduction <add>, %94, %cst_49 [1] : vector<7x128xf32> to vector<7xf32>
    %96 = vector.shape_cast %95 : vector<7xf32> to vector<7x1xf32>
    %97 = arith.subf %89, %96 : vector<7x1xf32>
    %c-1_i32 = arith.constant -1 : i32
    %98 = vector.broadcast %c-1_i32 : i32 to vector<7x1xi32>
    %99 = arith.cmpi ne, %80, %98 : vector<7x1xi32>
    %100 = arith.extui %99 : vector<7x1xi1> to vector<7x1xi32>
    %101 = arith.sitofp %100 : vector<7x1xi32> to vector<7x1xf32>
    %102 = vector.broadcast %82 : vector<7x1xf32> to vector<7x128xf32>
    %103 = arith.cmpf oeq, %78, %102 : vector<7x128xf32>
    %c128_i32 = arith.constant 128 : i32
    %104 = vector.broadcast %c128_i32 : i32 to vector<7x128xi32>
    %105 = arith.select %103, %90, %104 : vector<7x128xi1>, vector<7x128xi32>
    %cst_50 = arith.constant dense<2147483647> : vector<7xi32>
    %106 = vector.multi_reduction <minsi>, %105, %cst_50 [1] : vector<7x128xi32> to vector<7xi32>
    %107 = vector.shape_cast %106 : vector<7xi32> to vector<7x1xi32>
    %108 = arith.cmpi eq, %107, %80 : vector<7x1xi32>
    %109 = arith.extui %108 : vector<7x1xi1> to vector<7x1xi32>
    %110 = arith.sitofp %109 : vector<7x1xi32> to vector<7x1xf32>
    %111 = arith.mulf %110, %101 : vector<7x1xf32>
    %112 = arith.mulf %97, %101 : vector<7x1xf32>
    %113 = vector.shape_cast %112 : vector<7x1xf32> to vector<1x7x1xf32>
    %cst_51 = arith.constant dense<0.000000e+00> : vector<1xf32>
    %114 = vector.multi_reduction <add>, %113, %cst_51 [1, 2] : vector<1x7x1xf32> to vector<1xf32>
    %115 = vector.shape_cast %114 : vector<1xf32> to vector<1x1x1xf32>
    %116 = vector.extract %115[0, 0, 0] : f32 from vector<1x1x1xf32>
    %117 = vector.shape_cast %101 : vector<7x1xf32> to vector<1x7x1xf32>
    %cst_52 = arith.constant dense<0.000000e+00> : vector<1xf32>
    %118 = vector.multi_reduction <add>, %117, %cst_52 [1, 2] : vector<1x7x1xf32> to vector<1xf32>
    %119 = vector.shape_cast %118 : vector<1xf32> to vector<1x1x1xf32>
    %120 = vector.extract %119[0, 0, 0] : f32 from vector<1x1x1xf32>
    %121 = vector.shape_cast %111 : vector<7x1xf32> to vector<1x7x1xf32>
    %cst_53 = arith.constant dense<0.000000e+00> : vector<1xf32>
    %122 = vector.multi_reduction <add>, %121, %cst_53 [1, 2] : vector<1x7x1xf32> to vector<1xf32>
    %123 = vector.shape_cast %122 : vector<1xf32> to vector<1x1x1xf32>
    %124 = vector.extract %123[0, 0, 0] : f32 from vector<1x1x1xf32>
    %125 = arith.subf %101, %111 : vector<7x1xf32>
    %126 = vector.shape_cast %125 : vector<7x1xf32> to vector<1x7x1xf32>
    %cst_54 = arith.constant dense<0.000000e+00> : vector<1x1xf32>
    %127 = vector.multi_reduction <add>, %126, %cst_54 [1] : vector<1x7x1xf32> to vector<1x1xf32>
    %128 = vector.shape_cast %127 : vector<1x1xf32> to vector<1x1x1xf32>
    %cst_55 = arith.constant 0.000000e+00 : f32
    %129 = vector.broadcast %cst_55 : f32 to vector<1x1x1xf32>
    %130 = arith.cmpf oeq, %128, %129 : vector<1x1x1xf32>
    %131 = arith.extui %130 : vector<1x1x1xi1> to vector<1x1x1xi32>
    %132 = arith.sitofp %131 : vector<1x1x1xi32> to vector<1x1x1xf32>
    %133 = vector.shape_cast %132 : vector<1x1x1xf32> to vector<1x1x1x1xf32>
    %cst_56 = arith.constant dense<0.000000e+00> : vector<1xf32>
    %134 = vector.multi_reduction <add>, %133, %cst_56 [1, 2, 3] : vector<1x1x1x1xf32> to vector<1xf32>
    %135 = vector.shape_cast %134 : vector<1xf32> to vector<1x1x1x1xf32>
    %136 = vector.extract %135[0, 0, 0, 0] : f32 from vector<1x1x1x1xf32>
    %137 = tpu.iota {dimensions = array<i32: 1>} : vector<1x128xi32>
    %c0_i32 = arith.constant 0 : i32
    %138 = vector.broadcast %c0_i32 : i32 to vector<1x128xi32>
    %139 = arith.cmpi eq, %137, %138 : vector<1x128xi32>
    %c1_i32 = arith.constant 1 : i32
    %140 = vector.broadcast %c1_i32 : i32 to vector<1x128xi32>
    %141 = arith.cmpi eq, %137, %140 : vector<1x128xi32>
    %c2_i32 = arith.constant 2 : i32
    %142 = vector.broadcast %c2_i32 : i32 to vector<1x128xi32>
    %143 = arith.cmpi eq, %137, %142 : vector<1x128xi32>
    %c3_i32 = arith.constant 3 : i32
    %144 = vector.broadcast %c3_i32 : i32 to vector<1x128xi32>
    %145 = arith.cmpi eq, %137, %144 : vector<1x128xi32>
    %cst_57 = arith.constant 0.000000e+00 : f32
    %146 = vector.broadcast %136 : f32 to vector<1x128xf32>
    %147 = vector.broadcast %cst_57 : f32 to vector<1x128xf32>
    %148 = arith.select %145, %146, %147 : vector<1x128xi1>, vector<1x128xf32>
    %149 = vector.broadcast %124 : f32 to vector<1x128xf32>
    %150 = arith.select %143, %149, %148 : vector<1x128xi1>, vector<1x128xf32>
    %151 = vector.broadcast %120 : f32 to vector<1x128xf32>
    %152 = arith.select %141, %151, %150 : vector<1x128xi1>, vector<1x128xf32>
    %153 = vector.broadcast %116 : f32 to vector<1x128xf32>
    %154 = arith.select %139, %153, %152 : vector<1x128xi1>, vector<1x128xf32>
    %c0_58 = arith.constant 0 : index
    %c0_59 = arith.constant 0 : index
    %c0_60 = arith.constant 0 : index
    %155 = vector.load %arg14[%c0_58, %c0_59, %c0_60] : memref<1x1x128xf32, #tpu.memory_space<vmem>>, vector<1x1x128xf32>
    %156 = vector.shape_cast %155 : vector<1x1x128xf32> to vector<1x128xf32>
    %157 = vector.shape_cast %154 : vector<1x128xf32> to vector<1x1x128xf32>
    tpu.vector_store %arg14[%c0_58, %c0_59, %c0_60], %157 {strides = array<i32>} : memref<1x1x128xf32, #tpu.memory_space<vmem>>, vector<1x1x128xf32>,
    return
  }
  func.func @transform_0(%arg0: i32) -> (i32, i32, i32) {
    %c0_i32 = arith.constant 0 : i32
    %c0_i32_0 = arith.constant 0 : i32
    %c0_i32_1 = arith.constant 0 : i32
    return %arg0, %c0_i32, %c0_i32_0 : i32, i32, i32
  }
  func.func @transform_1(%arg0: i32) -> (i32, i32, i32) {
    %c0_i32 = arith.constant 0 : i32
    %c0_i32_0 = arith.constant 0 : i32
    %c0_i32_1 = arith.constant 0 : i32
    return %arg0, %c0_i32, %c0_i32_0 : i32, i32, i32
  }
  func.func @transform_2(%arg0: i32) -> (i32, i32, i32) {
    %c0_i32 = arith.constant 0 : i32
    %c0_i32_0 = arith.constant 0 : i32
    %c0_i32_1 = arith.constant 0 : i32
    return %arg0, %c0_i32, %c0_i32_0 : i32, i32, i32
  }
  func.func @transform_3(%arg0: i32) -> (i32, i32, i32) {
    %c0_i32 = arith.constant 0 : i32
    %c0_i32_0 = arith.constant 0 : i32
    %c0_i32_1 = arith.constant 0 : i32
    return %arg0, %c0_i32, %c0_i32_0 : i32, i32, i32
  }
  func.func @transform_4(%arg0: i32) -> (i32, i32) {
    %c0_i32 = arith.constant 0 : i32
    %c0_i32_0 = arith.constant 0 : i32
    %c0_i32_1 = arith.constant 0 : i32
    return %c0_i32, %c0_i32_0 : i32, i32
  }
  func.func @transform_5(%arg0: i32) -> (i32, i32) {
    %c0_i32 = arith.constant 0 : i32
    %c0_i32_0 = arith.constant 0 : i32
    %c0_i32_1 = arith.constant 0 : i32
    return %c0_i32, %c0_i32_0 : i32, i32
  }
  func.func @transform_6(%arg0: i32) -> (i32, i32) {
    %c0_i32 = arith.constant 0 : i32
    %c0_i32_0 = arith.constant 0 : i32
    %c0_i32_1 = arith.constant 0 : i32
    return %c0_i32, %c0_i32_0 : i32, i32
  }
  func.func @transform_7(%arg0: i32) -> (i32, i32) {
    %c0_i32 = arith.constant 0 : i32
    %c0_i32_0 = arith.constant 0 : i32
    %c0_i32_1 = arith.constant 0 : i32
    return %c0_i32, %c0_i32_0 : i32, i32
  }
  func.func @transform_8(%arg0: i32) -> (i32, i32) {
    %c0_i32 = arith.constant 0 : i32
    %c0_i32_0 = arith.constant 0 : i32
    %c0_i32_1 = arith.constant 0 : i32
    return %c0_i32, %c0_i32_0 : i32, i32
  }
  func.func @transform_9(%arg0: i32) -> (i32, i32) {
    %c0_i32 = arith.constant 0 : i32
    %c0_i32_0 = arith.constant 0 : i32
    %c0_i32_1 = arith.constant 0 : i32
    return %c0_i32, %c0_i32_0 : i32, i32
  }
  func.func @transform_10(%arg0: i32) -> (i32, i32) {
    %c0_i32 = arith.constant 0 : i32
    %c0_i32_0 = arith.constant 0 : i32
    %c0_i32_1 = arith.constant 0 : i32
    return %c0_i32, %c0_i32_0 : i32, i32
  }
  func.func @transform_11(%arg0: i32) -> (i32, i32) {
    %c0_i32 = arith.constant 0 : i32
    %c0_i32_0 = arith.constant 0 : i32
    %c0_i32_1 = arith.constant 0 : i32
    return %c0_i32, %c0_i32_0 : i32, i32
  }
  func.func @transform_12(%arg0: i32) -> (i32, i32) {
    %c0_i32 = arith.constant 0 : i32
    %c0_i32_0 = arith.constant 0 : i32
    %c0_i32_1 = arith.constant 0 : i32
    return %c0_i32, %c0_i32_0 : i32, i32
  }
  func.func @transform_13(%arg0: i32) -> (i32, i32, i32) {
    %c0_i32 = arith.constant 0 : i32
    %c0_i32_0 = arith.constant 0 : i32
    %c0_i32_1 = arith.constant 0 : i32
    return %arg0, %c0_i32, %c0_i32_0 : i32, i32, i32
  }
}

</mosaic_0001>

<llo_original>
// kernel: tpu_custom_call.1
$region0: #{tpu_custom_call.1}
  #allocation0 [shape = 'u32[]', space=smem, size = 0x4, offset = 0x4, fixed_abs, tag = 'smem constant byte address 0x4 - core index']
  #allocation1 [shape = 'u32[144,128]{1,0:T(1,128)}', space=vmem, size = 0x12000, scoped, tag = 'internal scratch']
  %s0 = inlined_call_operand.vmem [shape: f32[2,16,32], index: 0, kind: input, shape index: {}]
  %s1 = inlined_call_operand.vmem [shape: f32[2,1,16], index: 1, kind: input, shape index: {}]
  %s2 = inlined_call_operand.vmem [shape: f32[2,7,32], index: 2, kind: input, shape index: {}]
  %s3 = inlined_call_operand.vmem [shape: s32[2,7,1], index: 3, kind: input, shape index: {}]
  %s4 = inlined_call_operand.vmem [shape: bf16[32,32], index: 4, kind: input, shape index: {}]
  %s5 = inlined_call_operand.vmem [shape: bf16[32,32], index: 5, kind: input, shape index: {}]
  %s6 = inlined_call_operand.hbm [shape: bf16[32,32], index: 6, kind: input, shape index: {}]
  %s7 = inlined_call_operand.hbm [shape: bf16[32,32], index: 7, kind: input, shape index: {}]
  %s8 = inlined_call_operand.hbm [shape: bf16[32,32], index: 8, kind: input, shape index: {}]
  %s9 = inlined_call_operand.vmem [shape: bf16[32,32], index: 9, kind: input, shape index: {}]
  %s10 = inlined_call_operand.hbm [shape: bf16[32,32], index: 10, kind: input, shape index: {}]
  %s11 = inlined_call_operand.hbm [shape: bf16[32,128], index: 11, kind: input, shape index: {}]
  %s12 = inlined_call_operand.vmem [shape: f32[1,128], index: 12, kind: input, shape index: {}]
  %s13 = inlined_call_operand.hbm [shape: f32[2,1,128], index: 13, kind: output, shape index: {}]
  %s14 = sld [smem:[#allocation0]]
  $region105: #{tpu_custom_call.1} parent=0
    _
  %s16 = ssub.s32 1, %s14
  %s17 = scalar_select 0, %s16, %s14
  $region1: #{tpu_custom_call.1} parent=0
    #allocation2 [shape = 'u8[8192]{0}', space=vmem, size = 0x2000, scoped, tag = 'input window, operand 6, single buffered']
    #allocation3 [shape = 's32[2]{0}', space=sflag, size = 0x8, scoped, tag = 'scoped memory for tpu_custom_call.1']
    #allocation4 [shape = 's32[2]{0}', space=sflag, size = 0x8, scoped, tag = 'scoped memory for tpu_custom_call.1']
    #allocation5 [shape = 'u8[8192]{0}', space=vmem, size = 0x2000, scoped, tag = 'input window, operand 7, single buffered']
    #allocation6 [shape = 's32[1]{0}', space=sflag, size = 0x4, scoped, tag = 'scoped memory for tpu_custom_call.1']
    #allocation7 [shape = 'u8[8192]{0}', space=vmem, size = 0x2000, scoped, tag = 'input window, operand 8, single buffered']
    #allocation8 [shape = 'u8[8192]{0}', space=vmem, size = 0x2000, scoped, tag = 'input window, operand 10, single buffered']
    #allocation9 [shape = 's32[1]{0}', space=sflag, size = 0x4, scoped, tag = 'scoped memory for tpu_custom_call.1']
    #allocation10 [shape = 'u8[8192]{0}', space=vmem, size = 0x2000, scoped, tag = 'input window, operand 11, single buffered']
    #allocation11 [shape = 'u8[1024]{0}', space=vmem, size = 0x400, scoped, tag = 'output window, operand 0']
    %18 = vsyncpa [#allocation3], 0
    %19 = vsyncpa [#allocation6], 0
    %20 = vsyncpa [#allocation9], 0
    %21 = vsyncpa [#allocation4], 0
    %s22 = scalar_lea.sflag [#allocation4], 1
    %23 = vsyncpa %s22, 0
    loop: start=0, step=1, limit=4
    $region2: #{tpu_custom_call.1} parent=1 // loop_pre_header
      _
    $region3: #{tpu_custom_call.1} parent=1 // loop_header
      %s25 = sphi 0, %s29
      %p26 = scmp.ge.s32.totalorder %s25, 4
      %s35 = sphi 0, %s37
      %s38 = sphi 0, %s35
      %s39 = sphi 0, %s38
      %s55 = sphi 0, %s39
      %s61 = sphi 0, %s63
      %s64 = sphi 0, %s61
      %s65 = sphi 0, %s64
      %s81 = sphi 0, %s65
      %s87 = sphi 0, %s89
      %s90 = sphi 0, %s87
      %s91 = sphi 0, %s90
      %s107 = sphi 0, %s91
      %s113 = sphi 0, %s115
      %s116 = sphi 0, %s113
      %s117 = sphi 0, %s116
      %s133 = sphi 0, %s117
      %s137 = sphi 0, %s137
      %s139 = sphi 0, %s137
      %s140 = sphi 0, %s139
      %s154 = sphi 0, %s140
      %s158 = sphi 0, %s158
      %s160 = sphi 0, %s158
      %s161 = sphi 0, %s160
      %s175 = sphi 0, %s161
      %s179 = sphi 0, %s179
      %s181 = sphi 0, %s179
      %s182 = sphi 0, %s181
      %s196 = sphi 0, %s182
      %s200 = sphi 0, %s200
      %s202 = sphi 0, %s200
      %s203 = sphi 0, %s202
      %s217 = sphi 0, %s203
      %s221 = sphi 0, %s221
      %s223 = sphi 0, %s221
      %s224 = sphi 0, %s223
      %s238 = sphi 0, %s224
      %s242 = sphi 0, %s242
      %s244 = sphi 0, %s242
      %s245 = sphi 0, %s244
      %s259 = sphi 0, %s245
      %s263 = sphi 0, %s263
      %s265 = sphi 0, %s263
      %s266 = sphi 0, %s265
      %s280 = sphi 0, %s266
      %s284 = sphi 0, %s284
      %s286 = sphi 0, %s284
      %s287 = sphi 0, %s286
      %s301 = sphi 0, %s287
      %s305 = sphi 0, %s305
      %s307 = sphi 0, %s305
      %s308 = sphi 0, %s307
      %s322 = sphi 0, %s308
      %s328 = sphi 0, %s330
      %s331 = sphi 0, %s328
      %s332 = sphi 0, %s331
      %s348 = sphi 0, %s332
    $region4: #{tpu_custom_call.1} parent=1 // loop_header_branch
      %28 = sbr.rel (%p26) target = $region8
    $region5: #{tpu_custom_call.1} parent=1 // loop_body
      %s30 = ssub.s32 %s25, 1
      %s31 = ssub.s32 %s25, 2
      %s32 = sadd.s32 %s25, 1
      %s33 = ssub.s32 %s25, %s32
      %p34 = scmp.eq.s32.totalorder %s33, 0
      %s36 = sadd.s32 %s35, 1
      %s37 = scalar_select %p34, %s35, %s36
      %p40 = pneg %p34
      %p41 = scmp.eq.s32.totalorder %s25, 1
      %p42 = por %p40, %p41
      %p43 = scmp.ne.s32.totalorder %s35, %s38
      %p44 = scmp.eq.s32.totalorder %s25, 0
      %p45 = por %p43, %p44
      %p46 = scmp.ne.s32.totalorder %s35, %s38
      %p47 = scmp.eq.s32.totalorder %s30, 1
      %p48 = por %p46, %p47
      %p49 = scmp.ne.s32.totalorder %s38, %s39
      %p50 = scmp.eq.s32.totalorder %s30, 0
      %p51 = por %p49, %p50
      %p52 = scmp.ne.s32.totalorder %s38, %s39
      %p53 = scmp.eq.s32.totalorder %s31, 1
      %p54 = por %p52, %p53
      %p56 = scmp.ne.s32.totalorder %s39, %s55
      %p57 = scmp.eq.s32.totalorder %s31, 0
      %p58 = por %p56, %p57
      %s59 = ssub.s32 %s25, %s32
      %p60 = scmp.eq.s32.totalorder %s59, 0
      %s62 = sadd.s32 %s61, 1
      %s63 = scalar_select %p60, %s61, %s62
      %p66 = pneg %p60
      %p67 = scmp.eq.s32.totalorder %s25, 1
      %p68 = por %p66, %p67
      %p69 = scmp.ne.s32.totalorder %s61, %s64
      %p70 = scmp.eq.s32.totalorder %s25, 0
      %p71 = por %p69, %p70
      %p72 = scmp.ne.s32.totalorder %s61, %s64
      %p73 = scmp.eq.s32.totalorder %s30, 1
      %p74 = por %p72, %p73
      %p75 = scmp.ne.s32.totalorder %s64, %s65
      %p76 = scmp.eq.s32.totalorder %s30, 0
      %p77 = por %p75, %p76
      %p78 = scmp.ne.s32.totalorder %s64, %s65
      %p79 = scmp.eq.s32.totalorder %s31, 1
      %p80 = por %p78, %p79
      %p82 = scmp.ne.s32.totalorder %s65, %s81
      %p83 = scmp.eq.s32.totalorder %s31, 0
      %p84 = por %p82, %p83
      %s85 = ssub.s32 %s25, %s32
      %p86 = scmp.eq.s32.totalorder %s85, 0
      %s88 = sadd.s32 %s87, 1
      %s89 = scalar_select %p86, %s87, %s88
      %p92 = pneg %p86
      %p93 = scmp.eq.s32.totalorder %s25, 1
      %p94 = por %p92, %p93
      %p95 = scmp.ne.s32.totalorder %s87, %s90
      %p96 = scmp.eq.s32.totalorder %s25, 0
      %p97 = por %p95, %p96
      %p98 = scmp.ne.s32.totalorder %s87, %s90
      %p99 = scmp.eq.s32.totalorder %s30, 1
      %p100 = por %p98, %p99
      %p101 = scmp.ne.s32.totalorder %s90, %s91
      %p102 = scmp.eq.s32.totalorder %s30, 0
      %p103 = por %p101, %p102
      %p104 = scmp.ne.s32.totalorder %s90, %s91
      %p105 = scmp.eq.s32.totalorder %s31, 1
      %p106 = por %p104, %p105
      %p108 = scmp.ne.s32.totalorder %s91, %s107
      %p109 = scmp.eq.s32.totalorder %s31, 0
      %p110 = por %p108, %p109
      %s111 = ssub.s32 %s25, %s32
      %p112 = scmp.eq.s32.totalorder %s111, 0
      %s114 = sadd.s32 %s113, 1
      %s115 = scalar_select %p112, %s113, %s114
      %p118 = pneg %p112
      %p119 = scmp.eq.s32.totalorder %s25, 1
      %p120 = por %p118, %p119
      %p121 = scmp.ne.s32.totalorder %s113, %s116
      %p122 = scmp.eq.s32.totalorder %s25, 0
      %p123 = por %p121, %p122
      %p124 = scmp.ne.s32.totalorder %s113, %s116
      %p125 = scmp.eq.s32.totalorder %s30, 1
      %p126 = por %p124, %p125
      %p127 = scmp.ne.s32.totalorder %s116, %s117
      %p128 = scmp.eq.s32.totalorder %s30, 0
      %p129 = por %p127, %p128
      %p130 = scmp.ne.s32.totalorder %s116, %s117
      %p131 = scmp.eq.s32.totalorder %s31, 1
      %p132 = por %p130, %p131
      %p134 = scmp.ne.s32.totalorder %s117, %s133
      %p135 = scmp.eq.s32.totalorder %s31, 0
      %p136 = por %p134, %p135
      %s138 = sadd.s32 %s137, 1
      %p141 = scmp.eq.s32.totalorder %s25, 1
      %p142 = scmp.ne.s32.totalorder %s137, %s139
      %p143 = scmp.eq.s32.totalorder %s25, 0
      %p144 = por %p142, %p143
      %p145 = scmp.ne.s32.totalorder %s137, %s139
      %p146 = scmp.eq.s32.totalorder %s30, 1
      %p147 = por %p145, %p146
      %p148 = scmp.ne.s32.totalorder %s139, %s140
      %p149 = scmp.eq.s32.totalorder %s30, 0
      %p150 = por %p148, %p149
      %p151 = scmp.ne.s32.totalorder %s139, %s140
      %p152 = scmp.eq.s32.totalorder %s31, 1
      %p153 = por %p151, %p152
      %p155 = scmp.ne.s32.totalorder %s140, %s154
      %p156 = scmp.eq.s32.totalorder %s31, 0
      %p157 = por %p155, %p156
      %s159 = sadd.s32 %s158, 1
      %p162 = scmp.eq.s32.totalorder %s25, 1
      %p163 = scmp.ne.s32.totalorder %s158, %s160
      %p164 = scmp.eq.s32.totalorder %s25, 0
      %p165 = por %p163, %p164
      %p166 = scmp.ne.s32.totalorder %s158, %s160
      %p167 = scmp.eq.s32.totalorder %s30, 1
      %p168 = por %p166, %p167
      %p169 = scmp.ne.s32.totalorder %s160, %s161
      %p170 = scmp.eq.s32.totalorder %s30, 0
      %p171 = por %p169, %p170
      %p172 = scmp.ne.s32.totalorder %s160, %s161
      %p173 = scmp.eq.s32.totalorder %s31, 1
      %p174 = por %p172, %p173
      %p176 = scmp.ne.s32.totalorder %s161, %s175
      %p177 = scmp.eq.s32.totalorder %s31, 0
      %p178 = por %p176, %p177
      %s180 = sadd.s32 %s179, 1
      %p183 = scmp.eq.s32.totalorder %s25, 1
      %p184 = scmp.ne.s32.totalorder %s179, %s181
      %p185 = scmp.eq.s32.totalorder %s25, 0
      %p186 = por %p184, %p185
      %p187 = scmp.ne.s32.totalorder %s179, %s181
      %p188 = scmp.eq.s32.totalorder %s30, 1
      %p189 = por %p187, %p188
      %p190 = scmp.ne.s32.totalorder %s181, %s182
      %p191 = scmp.eq.s32.totalorder %s30, 0
      %p192 = por %p190, %p191
      %p193 = scmp.ne.s32.totalorder %s181, %s182
      %p194 = scmp.eq.s32.totalorder %s31, 1
      %p195 = por %p193, %p194
      %p197 = scmp.ne.s32.totalorder %s182, %s196
      %p198 = scmp.eq.s32.totalorder %s31, 0
      %p199 = por %p197, %p198
      %s201 = sadd.s32 %s200, 1
      %p204 = scmp.eq.s32.totalorder %s25, 1
      %p205 = scmp.ne.s32.totalorder %s200, %s202
      %p206 = scmp.eq.s32.totalorder %s25, 0
      %p207 = por %p205, %p206
      %p208 = scmp.ne.s32.totalorder %s200, %s202
      %p209 = scmp.eq.s32.totalorder %s30, 1
      %p210 = por %p208, %p209
      %p211 = scmp.ne.s32.totalorder %s202, %s203
      %p212 = scmp.eq.s32.totalorder %s30, 0
      %p213 = por %p211, %p212
      %p214 = scmp.ne.s32.totalorder %s202, %s203
      %p215 = scmp.eq.s32.totalorder %s31, 1
      %p216 = por %p214, %p215
      %p218 = scmp.ne.s32.totalorder %s203, %s217
      %p219 = scmp.eq.s32.totalorder %s31, 0
      %p220 = por %p218, %p219
      %s222 = sadd.s32 %s221, 1
      %p225 = scmp.eq.s32.totalorder %s25, 1
      %p226 = scmp.ne.s32.totalorder %s221, %s223
      %p227 = scmp.eq.s32.totalorder %s25, 0
      %p228 = por %p226, %p227
      %p229 = scmp.ne.s32.totalorder %s221, %s223
      %p230 = scmp.eq.s32.totalorder %s30, 1
      %p231 = por %p229, %p230
      %p232 = scmp.ne.s32.totalorder %s223, %s224
      %p233 = scmp.eq.s32.totalorder %s30, 0
      %p234 = por %p232, %p233
      %p235 = scmp.ne.s32.totalorder %s223, %s224
      %p236 = scmp.eq.s32.totalorder %s31, 1
      %p237 = por %p235, %p236
      %p239 = scmp.ne.s32.totalorder %s224, %s238
      %p240 = scmp.eq.s32.totalorder %s31, 0
      %p241 = por %p239, %p240
      %s243 = sadd.s32 %s242, 1
      %p246 = scmp.eq.s32.totalorder %s25, 1
      %p247 = scmp.ne.s32.totalorder %s242, %s244
      %p248 = scmp.eq.s32.totalorder %s25, 0
      %p249 = por %p247, %p248
      %p250 = scmp.ne.s32.totalorder %s242, %s244
      %p251 = scmp.eq.s32.totalorder %s30, 1
      %p252 = por %p250, %p251
      %p253 = scmp.ne.s32.totalorder %s244, %s245
      %p254 = scmp.eq.s32.totalorder %s30, 0
      %p255 = por %p253, %p254
      %p256 = scmp.ne.s32.totalorder %s244, %s245
      %p257 = scmp.eq.s32.totalorder %s31, 1
      %p258 = por %p256, %p257
      %p260 = scmp.ne.s32.totalorder %s245, %s259
      %p261 = scmp.eq.s32.totalorder %s31, 0
      %p262 = por %p260, %p261
      %s264 = sadd.s32 %s263, 1
      %p267 = scmp.eq.s32.totalorder %s25, 1
      %p268 = scmp.ne.s32.totalorder %s263, %s265
      %p269 = scmp.eq.s32.totalorder %s25, 0
      %p270 = por %p268, %p269
      %p271 = scmp.ne.s32.totalorder %s263, %s265
      %p272 = scmp.eq.s32.totalorder %s30, 1
      %p273 = por %p271, %p272
      %p274 = scmp.ne.s32.totalorder %s265, %s266
      %p275 = scmp.eq.s32.totalorder %s30, 0
      %p276 = por %p274, %p275
      %p277 = scmp.ne.s32.totalorder %s265, %s266
      %p278 = scmp.eq.s32.totalorder %s31, 1
      %p279 = por %p277, %p278
      %p281 = scmp.ne.s32.totalorder %s266, %s280
      %p282 = scmp.eq.s32.totalorder %s31, 0
      %p283 = por %p281, %p282
      %s285 = sadd.s32 %s284, 1
      %p288 = scmp.eq.s32.totalorder %s25, 1
      %p289 = scmp.ne.s32.totalorder %s284, %s286
      %p290 = scmp.eq.s32.totalorder %s25, 0
      %p291 = por %p289, %p290
      %p292 = scmp.ne.s32.totalorder %s284, %s286
      %p293 = scmp.eq.s32.totalorder %s30, 1
      %p294 = por %p292, %p293
      %p295 = scmp.ne.s32.totalorder %s286, %s287
      %p296 = scmp.eq.s32.totalorder %s30, 0
      %p297 = por %p295, %p296
      %p298 = scmp.ne.s32.totalorder %s286, %s287
      %p299 = scmp.eq.s32.totalorder %s31, 1
      %p300 = por %p298, %p299
      %p302 = scmp.ne.s32.totalorder %s287, %s301
      %p303 = scmp.eq.s32.totalorder %s31, 0
      %p304 = por %p302, %p303
      %s306 = sadd.s32 %s305, 1
      %p309 = scmp.eq.s32.totalorder %s25, 1
      %p310 = scmp.ne.s32.totalorder %s305, %s307
      %p311 = scmp.eq.s32.totalorder %s25, 0
      %p312 = por %p310, %p311
      %p313 = scmp.ne.s32.totalorder %s305, %s307
      %p314 = scmp.eq.s32.totalorder %s30, 1
      %p315 = por %p313, %p314
      %p316 = scmp.ne.s32.totalorder %s307, %s308
      %p317 = scmp.eq.s32.totalorder %s30, 0
      %p318 = por %p316, %p317
      %p319 = scmp.ne.s32.totalorder %s307, %s308
      %p320 = scmp.eq.s32.totalorder %s31, 1
      %p321 = por %p319, %p320
      %p323 = scmp.ne.s32.totalorder %s308, %s322
      %p324 = scmp.eq.s32.totalorder %s31, 0
      %p325 = por %p323, %p324
      %s326 = ssub.s32 %s25, %s32
      %p327 = scmp.eq.s32.totalorder %s326, 0
      %s329 = sadd.s32 %s328, 1
      %s330 = scalar_select %p327, %s328, %s329
      %p333 = pneg %p327
      %p334 = scmp.eq.s32.totalorder %s25, 1
      %p335 = por %p333, %p334
      %p336 = scmp.ne.s32.totalorder %s328, %s331
      %p337 = scmp.eq.s32.totalorder %s25, 0
      %p338 = por %p336, %p337
      %p339 = scmp.ne.s32.totalorder %s328, %s331
      %p340 = scmp.eq.s32.totalorder %s30, 1
      %p341 = por %p339, %p340
      %p342 = scmp.ne.s32.totalorder %s331, %s332
      %p343 = scmp.eq.s32.totalorder %s30, 0
      %p344 = por %p342, %p343
      %p345 = scmp.ne.s32.totalorder %s331, %s332
      %p346 = scmp.eq.s32.totalorder %s31, 1
      %p347 = por %p345, %p346
      %p349 = scmp.ne.s32.totalorder %s332, %s348
      %p350 = scmp.eq.s32.totalorder %s31, 0
      %p351 = por %p349, %p350
      %p352 = scmp.le.s32.totalorder 1, %s25
      %p353 = scmp.lt.s32.totalorder %s25, 3
      %p354 = pnand %p352, %p353
      %p355 = pneg %p354
      // Predicated region
      $region9: #{tpu_custom_call.1} parent=5 // pred_check
        _
      $region10: #{tpu_custom_call.1} parent=5 // pred_check_branch
        %357 = sbr.rel (%p354) target = $region12
      $region11: #{tpu_custom_call.1} parent=5 // pred_region
        %s358 = ssub.s32 %s25, 1
        // Predicated region
        $region13: #{tpu_custom_call.1} parent=11 // pred_check
          %p359 = pneg %p150
        $region14: #{tpu_custom_call.1} parent=11 // pred_check_branch
          %361 = sbr.rel (%p359) target = $region16
        $region15: #{tpu_custom_call.1} parent=11 // pred_region
          _
        $region16: #{tpu_custom_call.1} parent=11 // pred_fallthru
          _
        // Predicated region
        $region17: #{tpu_custom_call.1} parent=11 // pred_check
          %p362 = pneg %p171
        $region18: #{tpu_custom_call.1} parent=11 // pred_check_branch
          %364 = sbr.rel (%p362) target = $region20
        $region19: #{tpu_custom_call.1} parent=11 // pred_region
          _
        $region20: #{tpu_custom_call.1} parent=11 // pred_fallthru
          _
        // Predicated region
        $region21: #{tpu_custom_call.1} parent=11 // pred_check
          %p365 = pneg %p192
        $region22: #{tpu_custom_call.1} parent=11 // pred_check_branch
          %367 = sbr.rel (%p365) target = $region24
        $region23: #{tpu_custom_call.1} parent=11 // pred_region
          %s369 = ssub.s32 256, 256
          %370 = vsyncadd [#allocation3], %s369
          %s371 = sshll.u32 [#allocation2], 4
          %s372 = int_to_ptr.vmem [resolvable:$true] %s371
          %377 = dma.hbm_to_vmem [thread:$0]  %s6, 256, %s372, [#allocation3], 64, 64, 4
        $region24: #{tpu_custom_call.1} parent=11 // pred_fallthru
          _
        // Predicated region
        $region25: #{tpu_custom_call.1} parent=11 // pred_check
          %p378 = pneg %p213
        $region26: #{tpu_custom_call.1} parent=11 // pred_check_branch
          %380 = sbr.rel (%p378) target = $region28
        $region27: #{tpu_custom_call.1} parent=11 // pred_region
          %s382 = ssub.s32 256, 256
          %383 = vsyncadd [#allocation6], %s382
          %s384 = sshll.u32 [#allocation5], 4
          %s385 = int_to_ptr.vmem [resolvable:$true] %s384
          %390 = dma.hbm_to_vmem [thread:$0]  %s7, 256, %s385, [#allocation6], 64, 64, 4
        $region28: #{tpu_custom_call.1} parent=11 // pred_fallthru
          _
        // Predicated region
        $region29: #{tpu_custom_call.1} parent=11 // pred_check
          %p391 = pneg %p234
        $region30: #{tpu_custom_call.1} parent=11 // pred_check_branch
          %393 = sbr.rel (%p391) target = $region32
        $region31: #{tpu_custom_call.1} parent=11 // pred_region
          %s395 = ssub.s32 256, 256
          %396 = vsyncadd [#allocation6], %s395
          %s397 = sshll.u32 [#allocation7], 4
          %s398 = int_to_ptr.vmem [resolvable:$true] %s397
          %403 = dma.hbm_to_vmem [thread:$0]  %s8, 256, %s398, [#allocation6], 64, 64, 4
        $region32: #{tpu_custom_call.1} parent=11 // pred_fallthru
          _
        // Predicated region
        $region33: #{tpu_custom_call.1} parent=11 // pred_check
          %p404 = pneg %p255
        $region34: #{tpu_custom_call.1} parent=11 // pred_check_branch
          %406 = sbr.rel (%p404) target = $region36
        $region35: #{tpu_custom_call.1} parent=11 // pred_region
          _
        $region36: #{tpu_custom_call.1} parent=11 // pred_fallthru
          _
        // Predicated region
        $region37: #{tpu_custom_call.1} parent=11 // pred_check
          %p407 = pneg %p276
        $region38: #{tpu_custom_call.1} parent=11 // pred_check_branch
          %409 = sbr.rel (%p407) target = $region40
        $region39: #{tpu_custom_call.1} parent=11 // pred_region
          %s411 = ssub.s32 256, 256
          %412 = vsyncadd [#allocation9], %s411
          %s413 = sshll.u32 [#allocation8], 4
          %s414 = int_to_ptr.vmem [resolvable:$true] %s413
          %419 = dma.hbm_to_vmem [thread:$0]  %s10, 256, %s414, [#allocation9], 64, 64, 4
        $region40: #{tpu_custom_call.1} parent=11 // pred_fallthru
          _
        // Predicated region
        $region41: #{tpu_custom_call.1} parent=11 // pred_check
          %p420 = pneg %p297
        $region42: #{tpu_custom_call.1} parent=11 // pred_check_branch
          %422 = sbr.rel (%p420) target = $region44
        $region43: #{tpu_custom_call.1} parent=11 // pred_region
          %s424 = ssub.s32 256, 256
          %425 = vsyncadd [#allocation9], %s424
          %s426 = sshll.u32 [#allocation10], 4
          %s427 = int_to_ptr.vmem [resolvable:$true] %s426
          %432 = dma.hbm_to_vmem [thread:$0]  %s11, 256, %s427, [#allocation9], 64, 64, 4
        $region44: #{tpu_custom_call.1} parent=11 // pred_fallthru
          _
        // Predicated region
        $region45: #{tpu_custom_call.1} parent=11 // pred_check
          %p433 = pneg %p318
        $region46: #{tpu_custom_call.1} parent=11 // pred_check_branch
          %435 = sbr.rel (%p433) target = $region48
        $region47: #{tpu_custom_call.1} parent=11 // pred_region
          _
        $region48: #{tpu_custom_call.1} parent=11 // pred_fallthru
          _
      $region12: #{tpu_custom_call.1} parent=5 // pred_fallthru
        _
      %p436 = scmp.lt.s32.totalorder %s25, 2
      // Predicated region
      $region49: #{tpu_custom_call.1} parent=5 // pred_check
        %p437 = pneg %p436
      $region50: #{tpu_custom_call.1} parent=5 // pred_check_branch
        %439 = sbr.rel (%p437) target = $region52
      $region51: #{tpu_custom_call.1} parent=5 // pred_region
        // Predicated region
        $region53: #{tpu_custom_call.1} parent=51 // pred_check
          %p440 = pneg %p45
        $region54: #{tpu_custom_call.1} parent=51 // pred_check_branch
          %442 = sbr.rel (%p440) target = $region56
        $region55: #{tpu_custom_call.1} parent=51 // pred_region
          %p443 = scmp.lt.s32.totalorder %s25, 1
          %s444 = scalar_select %p443, %s25, 1
          %s445 = smul.addr %s444, 2
          %s446 = smul.addr %s445, 8
          %s447 = scalar_lea.vmem %s0, %s446
        $region56: #{tpu_custom_call.1} parent=51 // pred_fallthru
          _
        // Predicated region
        $region57: #{tpu_custom_call.1} parent=51 // pred_check
          %p448 = pneg %p71
        $region58: #{tpu_custom_call.1} parent=51 // pred_check_branch
          %450 = sbr.rel (%p448) target = $region60
        $region59: #{tpu_custom_call.1} parent=51 // pred_region
          %p451 = scmp.lt.s32.totalorder %s25, 1
          %s452 = scalar_select %p451, %s25, 1
          %s453 = scalar_lea.vmem %s1, %s452
        $region60: #{tpu_custom_call.1} parent=51 // pred_fallthru
          _
        // Predicated region
        $region61: #{tpu_custom_call.1} parent=51 // pred_check
          %p454 = pneg %p97
        $region62: #{tpu_custom_call.1} parent=51 // pred_check_branch
          %456 = sbr.rel (%p454) target = $region64
        $region63: #{tpu_custom_call.1} parent=51 // pred_region
          %p457 = scmp.lt.s32.totalorder %s25, 1
          %s458 = scalar_select %p457, %s25, 1
          %s459 = smul.addr %s458, 8
          %s460 = scalar_lea.vmem %s2, %s459
        $region64: #{tpu_custom_call.1} parent=51 // pred_fallthru
          _
        // Predicated region
        $region65: #{tpu_custom_call.1} parent=51 // pred_check
          %p461 = pneg %p123
        $region66: #{tpu_custom_call.1} parent=51 // pred_check_branch
          %463 = sbr.rel (%p461) target = $region68
        $region67: #{tpu_custom_call.1} parent=51 // pred_region
          %p464 = scmp.lt.s32.totalorder %s25, 1
          %s465 = scalar_select %p464, %s25, 1
          %s466 = smul.addr %s465, 8
          %s467 = scalar_lea.vmem %s3, %s466
        $region68: #{tpu_custom_call.1} parent=51 // pred_fallthru
          _
      $region52: #{tpu_custom_call.1} parent=5 // pred_fallthru
        _
      %p468 = scmp.le.s32.totalorder 1, %s25
      %p469 = scmp.lt.s32.totalorder %s25, 3
      %p470 = pnand %p468, %p469
      %p471 = pneg %p470
      // Predicated region
      $region69: #{tpu_custom_call.1} parent=5 // pred_check
        _
      $region70: #{tpu_custom_call.1} parent=5 // pred_check_branch
        %473 = sbr.rel (%p470) target = $region72
      $region71: #{tpu_custom_call.1} parent=5 // pred_region
        %s474 = ssub.s32 %s25, 1
        // Predicated region
        $region73: #{tpu_custom_call.1} parent=71 // pred_check
          %p475 = pneg %p192
        $region74: #{tpu_custom_call.1} parent=71 // pred_check_branch
          %477 = sbr.rel (%p475) target = $region76
        $region75: #{tpu_custom_call.1} parent=71 // pred_region
          %478 = dma.done [#allocation3], 256
        $region76: #{tpu_custom_call.1} parent=71 // pred_fallthru
          _
        // Predicated region
        $region77: #{tpu_custom_call.1} parent=71 // pred_check
          %p479 = pneg %p213
        $region78: #{tpu_custom_call.1} parent=71 // pred_check_branch
          %481 = sbr.rel (%p479) target = $region80
        $region79: #{tpu_custom_call.1} parent=71 // pred_region
          %482 = dma.done [#allocation6], 256
        $region80: #{tpu_custom_call.1} parent=71 // pred_fallthru
          _
        // Predicated region
        $region81: #{tpu_custom_call.1} parent=71 // pred_check
          %p483 = pneg %p234
        $region82: #{tpu_custom_call.1} parent=71 // pred_check_branch
          %485 = sbr.rel (%p483) target = $region84
        $region83: #{tpu_custom_call.1} parent=71 // pred_region
          %486 = dma.done [#allocation6], 256
        $region84: #{tpu_custom_call.1} parent=71 // pred_fallthru
          _
        // Predicated region
        $region85: #{tpu_custom_call.1} parent=71 // pred_check
          %p487 = pneg %p276
        $region86: #{tpu_custom_call.1} parent=71 // pred_check_branch
          %489 = sbr.rel (%p487) target = $region88
        $region87: #{tpu_custom_call.1} parent=71 // pred_region
          %490 = dma.done [#allocation9], 256
        $region88: #{tpu_custom_call.1} parent=71 // pred_fallthru
          _
        // Predicated region
        $region89: #{tpu_custom_call.1} parent=71 // pred_check
          %p491 = pneg %p297
        $region90: #{tpu_custom_call.1} parent=71 // pred_check_branch
          %493 = sbr.rel (%p491) target = $region92
        $region91: #{tpu_custom_call.1} parent=71 // pred_region
          %494 = dma.done [#allocation9], 256
        $region92: #{tpu_custom_call.1} parent=71 // pred_fallthru
          _
        %p495 = scmp.lt.s32.totalorder %s30, 1
        %s496 = scalar_select %p495, %s30, 1
        %s497 = smul.addr %s496, 2
        %s498 = smul.addr %s497, 8
        %s499 = scalar_lea.vmem %s0, %s498
        %p500 = pneg %p51
        %p501 = pneg %p48
        %p502 = scmp.lt.s32.totalorder %s30, 1
        %s503 = scalar_select %p502, %s30, 1
        %s504 = scalar_lea.vmem %s1, %s503
        %p505 = pneg %p77
        %p506 = pneg %p74
        %p507 = scmp.lt.s32.totalorder %s30, 1
        %s508 = scalar_select %p507, %s30, 1
        %s509 = smul.addr %s508, 8
        %s510 = scalar_lea.vmem %s2, %s509
        %p511 = pneg %p103
        %p512 = pneg %p100
        %p513 = scmp.lt.s32.totalorder %s30, 1
        %s514 = scalar_select %p513, %s30, 1
        %s515 = smul.addr %s514, 8
        %s516 = scalar_lea.vmem %s3, %s515
        %p517 = pneg %p129
        %p518 = pneg %p126
        %p519 = pneg %p150
        %p520 = pneg %p147
        %p521 = pneg %p171
        %p522 = pneg %p168
        %p523 = pneg %p192
        %p524 = pneg %p189
        %p525 = pneg %p213
        %p526 = pneg %p210
        %p527 = pneg %p234
        %p528 = pneg %p231
        %p529 = pneg %p255
        %p530 = pneg %p252
        %p531 = pneg %p276
        %p532 = pneg %p273
        %p533 = pneg %p297
        %p534 = pneg %p294
        %p535 = pneg %p318
        %p536 = pneg %p315
        %p537 = pneg %p344
        %p538 = pneg %p341
        %s539 = sand.u32 %s331, 1
        %s540 = scalar_lea.sflag [#allocation4], %s539
        %s541 = sand.u32 %s331, 1
        %s542 = scalar_lea.vmem [#allocation11], %s541
        %p543 = scmp.lt.s32.totalorder %s30, 1
        %s544 = scalar_select %p543, %s30, 1
        %s545 = smul.addr %s544, 2
        %s546 = smul.addr %s545, 8
        %s547 = scalar_lea.vmem %s0, %s546
        %p548 = scmp.lt.s32.totalorder %s30, 1
        %s549 = scalar_select %p548, %s30, 1
        %s550 = scalar_lea.vmem %s1, %s549
        %p551 = scmp.lt.s32.totalorder %s30, 1
        %s552 = scalar_select %p551, %s30, 1
        %s553 = smul.addr %s552, 8
        %s554 = scalar_lea.vmem %s2, %s553
        %p555 = scmp.lt.s32.totalorder %s30, 1
        %s556 = scalar_select %p555, %s30, 1
        %s557 = smul.addr %s556, 8
        %s558 = scalar_lea.vmem %s3, %s557
        %v560 = vld [vmem:[%s547] sm:$0xff]
        %v561 = vld [vmem:[%s547 + $0x8] sm:$0xff]
        %v562 = vld [vmem:[%s550] sm:$0x1]
        %v563 = vpack.c.bf16 %v561, %v560
        %v564 = vld [vmem:[%s4] sm:$0xf]
        %v565 = vld [vmem:[%s4 + $0x4] sm:$0xf]
        %v566 = vld [vmem:[%s4 + $0x8] sm:$0xf]
        %v567 = vld [vmem:[%s4 + $0xc] sm:$0xf]
        %v572 = vunpack.c.l.b16 %v564
        %v573 = vunpack.c.l.b16 %v565
        %v574 = vunpack.c.l.b16 %v566
        %v575 = vunpack.c.l.b16 %v567
        %v576 = vpack.c.b16 %v573, %v572
        %v577 = vpack.c.b16 %v575, %v574
        %vm580 = vcmask 261120
        %v582 = vsel %vm580, %v563, 0
        %584 = vmatprep.subr.bf16.mxu0 0
        %585 = vmatpush1.bf16.msra.mxu0 %v576
        %586 = vmatprep.subr.bf16.mxu0 0
        %587 = vmatpush1.bf16.msra.mxu0 %v577
        %588 = vmatprep.subr.bf16.mxu0 0
        %589 = vmatpush1.bf16.msra.mxu0 0
        %590 = vmatprep.subr.bf16.mxu0 0
        %591 = vmatpush1.bf16.msra.mxu0 0
        %592 = vmatprep.subr.bf16.mxu0 0
        %593 = vmatpush1.bf16.msra.mxu0 0
        %594 = vmatprep.subr.bf16.mxu0 0
        %595 = vmatpush1.bf16.msra.mxu0 0
        %596 = vmatprep.subr.bf16.mxu0 0
        %597 = vmatpush1.bf16.msra.mxu0 0
        %598 = vmatprep.subr.bf16.mxu0 0
        %599 = vmatpush1.bf16.msra.mxu0 0
        %600 = vmatprep.subr.bf16.mxu0 0
        %601 = vmatpush1.bf16.msra.mxu0 0
        %602 = vmatprep.subr.bf16.mxu0 0
        %603 = vmatpush1.bf16.msra.mxu0 0
        %604 = vmatprep.subr.bf16.mxu0 0
        %605 = vmatpush1.bf16.msra.mxu0 0
        %606 = vmatprep.subr.bf16.mxu0 0
        %607 = vmatpush1.bf16.msra.mxu0 0
        %608 = vmatprep.subr.bf16.mxu0 0
        %609 = vmatpush1.bf16.msra.mxu0 0
        %610 = vmatprep.subr.bf16.mxu0 0
        %611 = vmatpush1.bf16.msra.mxu0 0
        %612 = vmatprep.subr.bf16.mxu0 0
        %613 = vmatpush1.bf16.msra.mxu0 0
        %614 = vmatprep.subr.bf16.mxu0 0
        %615 = vmatpush1.bf16.msra.mxu0 0
        %616 = vmatprep.mubr.bf16.mxu0 0
        %617 = vmatmul.mubr.bf16.gmra.mrb[0].mxu0 %v582
        %v618 = vpop.f32.mrb[0].mxu0
        %v619 = vadd.f32 0.0, %v618
        %v620 = vpop.f32.mrb[0].mxu0
        %v621 = vpop.f32.mrb[0].mxu0
        %v622 = vadd.f32 0.0, %v621
        %v623 = vpop.f32.mrb[0].mxu0
        %624 = vdwg.mxu0
        %v625 = vld [vmem:[%s5] sm:$0xf]
        %v626 = vld [vmem:[%s5 + $0x4] sm:$0xf]
        %v627 = vld [vmem:[%s5 + $0x8] sm:$0xf]
        %v628 = vld [vmem:[%s5 + $0xc] sm:$0xf]
        %v633 = vunpack.c.l.b16 %v625
        %v634 = vunpack.c.l.b16 %v626
        %v635 = vunpack.c.l.b16 %v627
        %v636 = vunpack.c.l.b16 %v628
        %v637 = vpack.c.b16 %v634, %v633
        %v638 = vpack.c.b16 %v636, %v635
        %641 = vmatprep.subr.bf16.mxu0 0
        %642 = vmatpush1.bf16.msra.mxu0 %v637
        %643 = vmatprep.subr.bf16.mxu0 0
        %644 = vmatpush1.bf16.msra.mxu0 %v638
        %645 = vmatprep.subr.bf16.mxu0 0
        %646 = vmatpush1.bf16.msra.mxu0 0
        %647 = vmatprep.subr.bf16.mxu0 0
        %648 = vmatpush1.bf16.msra.mxu0 0
        %649 = vmatprep.subr.bf16.mxu0 0
        %650 = vmatpush1.bf16.msra.mxu0 0
        %651 = vmatprep.subr.bf16.mxu0 0
        %652 = vmatpush1.bf16.msra.mxu0 0
        %653 = vmatprep.subr.bf16.mxu0 0
        %654 = vmatpush1.bf16.msra.mxu0 0
        %655 = vmatprep.subr.bf16.mxu0 0
        %656 = vmatpush1.bf16.msra.mxu0 0
        %657 = vmatprep.subr.bf16.mxu0 0
        %658 = vmatpush1.bf16.msra.mxu0 0
        %659 = vmatprep.subr.bf16.mxu0 0
        %660 = vmatpush1.bf16.msra.mxu0 0
        %661 = vmatprep.subr.bf16.mxu0 0
        %662 = vmatpush1.bf16.msra.mxu0 0
        %663 = vmatprep.subr.bf16.mxu0 0
        %664 = vmatpush1.bf16.msra.mxu0 0
        %665 = vmatprep.subr.bf16.mxu0 0
        %666 = vmatpush1.bf16.msra.mxu0 0
        %667 = vmatprep.subr.bf16.mxu0 0
        %668 = vmatpush1.bf16.msra.mxu0 0
        %669 = vmatprep.subr.bf16.mxu0 0
        %670 = vmatpush1.bf16.msra.mxu0 0
        %671 = vmatprep.subr.bf16.mxu0 0
        %672 = vmatpush1.bf16.msra.mxu0 0
        %673 = vmatprep.mubr.bf16.mxu0 0
        %674 = vmatmul.mubr.bf16.gmra.mrb[0].mxu0 %v582
        %v675 = vpop.f32.mrb[0].mxu0
        %v676 = vadd.f32 0.0, %v675
        %v677 = vpop.f32.mrb[0].mxu0
        %v678 = vpop.f32.mrb[0].mxu0
        %v679 = vadd.f32 0.0, %v678
        %v680 = vpop.f32.mrb[0].mxu0
        %681 = vdwg.mxu0
        %v682 = vld [vmem:[#allocation2] sm:$0xf]
        %v683 = vld [vmem:[#allocation2 + $0x4] sm:$0xf]
        %v684 = vld [vmem:[#allocation2 + $0x8] sm:$0xf]
        %v685 = vld [vmem:[#allocation2 + $0xc] sm:$0xf]
        %v690 = vunpack.c.l.b16 %v682
        %v691 = vunpack.c.l.b16 %v683
        %v692 = vunpack.c.l.b16 %v684
        %v693 = vunpack.c.l.b16 %v685
        %v694 = vpack.c.b16 %v691, %v690
        %v695 = vpack.c.b16 %v693, %v692
        %698 = vmatprep.subr.bf16.mxu0 0
        %699 = vmatpush1.bf16.msra.mxu0 %v694
        %700 = vmatprep.subr.bf16.mxu0 0
        %701 = vmatpush1.bf16.msra.mxu0 %v695
        %702 = vmatprep.subr.bf16.mxu0 0
        %703 = vmatpush1.bf16.msra.mxu0 0
        %704 = vmatprep.subr.bf16.mxu0 0
        %705 = vmatpush1.bf16.msra.mxu0 0
        %706 = vmatprep.subr.bf16.mxu0 0
        %707 = vmatpush1.bf16.msra.mxu0 0
        %708 = vmatprep.subr.bf16.mxu0 0
        %709 = vmatpush1.bf16.msra.mxu0 0
        %710 = vmatprep.subr.bf16.mxu0 0
        %711 = vmatpush1.bf16.msra.mxu0 0
        %712 = vmatprep.subr.bf16.mxu0 0
        %713 = vmatpush1.bf16.msra.mxu0 0
        %714 = vmatprep.subr.bf16.mxu0 0
        %715 = vmatpush1.bf16.msra.mxu0 0
        %716 = vmatprep.subr.bf16.mxu0 0
        %717 = vmatpush1.bf16.msra.mxu0 0
        %718 = vmatprep.subr.bf16.mxu0 0
        %719 = vmatpush1.bf16.msra.mxu0 0
        %720 = vmatprep.subr.bf16.mxu0 0
        %721 = vmatpush1.bf16.msra.mxu0 0
        %722 = vmatprep.subr.bf16.mxu0 0
        %723 = vmatpush1.bf16.msra.mxu0 0
        %724 = vmatprep.subr.bf16.mxu0 0
        %725 = vmatpush1.bf16.msra.mxu0 0
        %726 = vmatprep.subr.bf16.mxu0 0
        %727 = vmatpush1.bf16.msra.mxu0 0
        %728 = vmatprep.subr.bf16.mxu0 0
        %729 = vmatpush1.bf16.msra.mxu0 0
        %730 = vmatprep.mubr.bf16.mxu0 0
        %731 = vmatmul.mubr.bf16.gmra.mrb[0].mxu0 %v582
        %v732 = vpop.f32.mrb[0].mxu0
        %v733 = vadd.f32 0.0, %v732
        %v734 = vpop.f32.mrb[0].mxu0
        %v735 = vpop.f32.mrb[0].mxu0
        %v736 = vadd.f32 0.0, %v735
        %v737 = vpop.f32.mrb[0].mxu0
        %738 = vdwg.mxu0
        %v739 = vpack.c.bf16 %v622, %v619
        %v740 = vpack.c.bf16 %v679, %v676
        %v742 = vsel %vm580, %v739, 0
        %v745 = vsel %vm580, %v740, 0
        %747 = vmatprep.subr.bf16.mxu0 0
        %748 = vmatpush1.bf16.xpose.msra.mxu0 %v745
        %749 = vmatprep.subr.bf16.mxu0 0
        %750 = vmatpush1.bf16.xpose.msra.mxu0 0
        %751 = vmatprep.subr.bf16.mxu0 0
        %752 = vmatpush1.bf16.xpose.msra.mxu0 0
        %753 = vmatprep.subr.bf16.mxu0 0
        %754 = vmatpush1.bf16.xpose.msra.mxu0 0
        %755 = vmatprep.subr.bf16.mxu0 0
        %756 = vmatpush1.bf16.xpose.msra.mxu0 0
        %757 = vmatprep.subr.bf16.mxu0 0
        %758 = vmatpush1.bf16.xpose.msra.mxu0 0
        %759 = vmatprep.subr.bf16.mxu0 0
        %760 = vmatpush1.bf16.xpose.msra.mxu0 0
        %761 = vmatprep.subr.bf16.mxu0 0
        %762 = vmatpush1.bf16.xpose.msra.mxu0 0
        %763 = vmatprep.subr.bf16.mxu0 0
        %764 = vmatpush1.bf16.xpose.msra.mxu0 0
        %765 = vmatprep.subr.bf16.mxu0 0
        %766 = vmatpush1.bf16.xpose.msra.mxu0 0
        %767 = vmatprep.subr.bf16.mxu0 0
        %768 = vmatpush1.bf16.xpose.msra.mxu0 0
        %769 = vmatprep.subr.bf16.mxu0 0
        %770 = vmatpush1.bf16.xpose.msra.mxu0 0
        %771 = vmatprep.subr.bf16.mxu0 0
        %772 = vmatpush1.bf16.xpose.msra.mxu0 0
        %773 = vmatprep.subr.bf16.mxu0 0
        %774 = vmatpush1.bf16.xpose.msra.mxu0 0
        %775 = vmatprep.subr.bf16.mxu0 0
        %776 = vmatpush1.bf16.xpose.msra.mxu0 0
        %777 = vmatprep.subr.bf16.mxu0 0
        %778 = vmatpush1.bf16.xpose.msra.mxu0 0
        %779 = vmatprep.mubr.bf16.mxu0 0
        %780 = vmatmul.mubr.bf16.gmra.mrb[0].mxu0 %v742
        %v781 = vpop.f32.mrb[0].mxu0
        %v782 = vadd.f32 0.0, %v781
        %v783 = vpop.f32.mrb[0].mxu0
        %v784 = vpop.f32.mrb[0].mxu0
        %v785 = vadd.f32 0.0, %v784
        %v786 = vpop.f32.mrb[0].mxu0
        %787 = vdwg.mxu0
        %v788 = vmul.f32 %v782, 0.17677669
        %v789 = vmul.f32 %v785, 0.17677669
        %v791 = vlaneseq
        %v792 = vshrl.u32 %v791, 7
        %v793 = vsub.s32 0, %v792
        %v794 = vrot.slane %v562, %v793
        %v796 = vadd.f32 %v788, %v794
        %v797 = vadd.f32 %v789, %v794
        %vm798 = vcmask 130048
        %v799 = vsel %vm798, %v796, -inf
        %800 = vmax.xlane.f32.xlu0 %v799
        %v801 = vpop.xlane.xlu0 %800
        %v802 = vsel %vm798, %v797, -inf
        %803 = vmax.xlane.f32.xlu0 %v802
        %v804 = vpop.xlane.xlu0 %803
        %v805 = vsub.f32 %v796, %v801
        %v806 = vsub.f32 %v797, %v804
        %v807 = vmul.f32 %v805, 1.442695
        %v808 = vpow.pop %v807
        %v809 = vmul.f32 %v806, 1.442695
        %v810 = vpow.pop %v809
        %v811 = vsel %vm798, %v808, 0.0
        %812 = vadd.xlane.f32.xlu0 %v811
        %v813 = vpop.xlane.xlu0 %812
        %v814 = vsel %vm798, %v810, 0.0
        %815 = vadd.xlane.f32.xlu0 %v814
        %v816 = vpop.xlane.xlu0 %815
        %v817 = vrcp.pop %v813
        %v818 = vrcp.pop %v816
        %v819 = vmul.f32 %v808, %v817
        %v820 = vmul.f32 %v810, %v818
        %v821 = vpack.c.bf16 %v820, %v819
        %v822 = vpack.c.bf16 %v736, %v733
        %v824 = vsel %vm798, %v821, 0
        %826 = vmatprep.subr.bf16.mxu0 0
        %827 = vmatpush1.bf16.msra.mxu0 %v822
        %828 = vmatprep.subr.bf16.mxu0 0
        %829 = vmatpush1.bf16.msra.mxu0 0
        %830 = vmatprep.subr.bf16.mxu0 0
        %831 = vmatpush1.bf16.msra.mxu0 0
        %832 = vmatprep.subr.bf16.mxu0 0
        %833 = vmatpush1.bf16.msra.mxu0 0
        %834 = vmatprep.subr.bf16.mxu0 0
        %835 = vmatpush1.bf16.msra.mxu0 0
        %836 = vmatprep.subr.bf16.mxu0 0
        %837 = vmatpush1.bf16.msra.mxu0 0
        %838 = vmatprep.subr.bf16.mxu0 0
        %839 = vmatpush1.bf16.msra.mxu0 0
        %840 = vmatprep.subr.bf16.mxu0 0
        %841 = vmatpush1.bf16.msra.mxu0 0
        %842 = vmatprep.subr.bf16.mxu0 0
        %843 = vmatpush1.bf16.msra.mxu0 0
        %844 = vmatprep.subr.bf16.mxu0 0
        %845 = vmatpush1.bf16.msra.mxu0 0
        %846 = vmatprep.subr.bf16.mxu0 0
        %847 = vmatpush1.bf16.msra.mxu0 0
        %848 = vmatprep.subr.bf16.mxu0 0
        %849 = vmatpush1.bf16.msra.mxu0 0
        %850 = vmatprep.subr.bf16.mxu0 0
        %851 = vmatpush1.bf16.msra.mxu0 0
        %852 = vmatprep.subr.bf16.mxu0 0
        %853 = vmatpush1.bf16.msra.mxu0 0
        %854 = vmatprep.subr.bf16.mxu0 0
        %855 = vmatpush1.bf16.msra.mxu0 0
        %856 = vmatprep.subr.bf16.mxu0 0
        %857 = vmatpush1.bf16.msra.mxu0 0
        %858 = vmatprep.mubr.bf16.mxu0 0
        %859 = vmatmul.mubr.bf16.gmra.mrb[0].mxu0 %v824
        %v860 = vpop.f32.mrb[0].mxu0
        %v861 = vadd.f32 0.0, %v860
        %v862 = vpop.f32.mrb[0].mxu0
        %v863 = vpop.f32.mrb[0].mxu0
        %v864 = vadd.f32 0.0, %v863
        %v865 = vpop.f32.mrb[0].mxu0
        %866 = vdwg.mxu0
        %v867 = vpack.c.bf16 %v864, %v861
        %v868 = vld [vmem:[#allocation5] sm:$0xf]
        %v869 = vld [vmem:[#allocation5 + $0x4] sm:$0xf]
        %v870 = vld [vmem:[#allocation5 + $0x8] sm:$0xf]
        %v871 = vld [vmem:[#allocation5 + $0xc] sm:$0xf]
        %v876 = vunpack.c.l.b16 %v868
        %v877 = vunpack.c.l.b16 %v869
        %v878 = vunpack.c.l.b16 %v870
        %v879 = vunpack.c.l.b16 %v871
        %v880 = vpack.c.b16 %v877, %v876
        %v881 = vpack.c.b16 %v879, %v878
        %v885 = vsel %vm580, %v867, 0
        %887 = vmatprep.subr.bf16.mxu0 0
        %888 = vmatpush1.bf16.msra.mxu0 %v880
        %889 = vmatprep.subr.bf16.mxu0 0
        %890 = vmatpush1.bf16.msra.mxu0 %v881
        %891 = vmatprep.subr.bf16.mxu0 0
        %892 = vmatpush1.bf16.msra.mxu0 0
        %893 = vmatprep.subr.bf16.mxu0 0
        %894 = vmatpush1.bf16.msra.mxu0 0
        %895 = vmatprep.subr.bf16.mxu0 0
        %896 = vmatpush1.bf16.msra.mxu0 0
        %897 = vmatprep.subr.bf16.mxu0 0
        %898 = vmatpush1.bf16.msra.mxu0 0
        %899 = vmatprep.subr.bf16.mxu0 0
        %900 = vmatpush1.bf16.msra.mxu0 0
        %901 = vmatprep.subr.bf16.mxu0 0
        %902 = vmatpush1.bf16.msra.mxu0 0
        %903 = vmatprep.subr.bf16.mxu0 0
        %904 = vmatpush1.bf16.msra.mxu0 0
        %905 = vmatprep.subr.bf16.mxu0 0
        %906 = vmatpush1.bf16.msra.mxu0 0
        %907 = vmatprep.subr.bf16.mxu0 0
        %908 = vmatpush1.bf16.msra.mxu0 0
        %909 = vmatprep.subr.bf16.mxu0 0
        %910 = vmatpush1.bf16.msra.mxu0 0
        %911 = vmatprep.subr.bf16.mxu0 0
        %912 = vmatpush1.bf16.msra.mxu0 0
        %913 = vmatprep.subr.bf16.mxu0 0
        %914 = vmatpush1.bf16.msra.mxu0 0
        %915 = vmatprep.subr.bf16.mxu0 0
        %916 = vmatpush1.bf16.msra.mxu0 0
        %917 = vmatprep.subr.bf16.mxu0 0
        %918 = vmatpush1.bf16.msra.mxu0 0
        %919 = vmatprep.mubr.bf16.mxu0 0
        %920 = vmatmul.mubr.bf16.gmra.mrb[0].mxu0 %v885
        %v921 = vpop.f32.mrb[0].mxu0
        %v922 = vadd.f32 %v560, %v921
        %v923 = vpop.f32.mrb[0].mxu0
        %v924 = vpop.f32.mrb[0].mxu0
        %v925 = vadd.f32 %v561, %v924
        %v926 = vpop.f32.mrb[0].mxu0
        %927 = vdwg.mxu0
        %v928 = vtanh.pop %v922
        %v929 = vtanh.pop %v925
        %v930 = vpack.c.bf16 %v929, %v928
        %v931 = vld [vmem:[%s554] sm:$0x7f]
        %v932 = vpack.c.bf16 %v931, %v931
        %v933 = vld [vmem:[#allocation7] sm:$0xf]
        %v934 = vld [vmem:[#allocation7 + $0x4] sm:$0xf]
        %v935 = vld [vmem:[#allocation7 + $0x8] sm:$0xf]
        %v936 = vld [vmem:[#allocation7 + $0xc] sm:$0xf]
        %v941 = vunpack.c.l.b16 %v933
        %v942 = vunpack.c.l.b16 %v934
        %v943 = vunpack.c.l.b16 %v935
        %v944 = vunpack.c.l.b16 %v936
        %v945 = vpack.c.b16 %v942, %v941
        %v946 = vpack.c.b16 %v944, %v943
        %v950 = vsel %vm580, %v932, 0
        %952 = vmatprep.subr.bf16.mxu0 0
        %953 = vmatpush1.bf16.msra.mxu0 %v945
        %954 = vmatprep.subr.bf16.mxu0 0
        %955 = vmatpush1.bf16.msra.mxu0 %v946
        %956 = vmatprep.subr.bf16.mxu0 0
        %957 = vmatpush1.bf16.msra.mxu0 0
        %958 = vmatprep.subr.bf16.mxu0 0
        %959 = vmatpush1.bf16.msra.mxu0 0
        %960 = vmatprep.subr.bf16.mxu0 0
        %961 = vmatpush1.bf16.msra.mxu0 0
        %962 = vmatprep.subr.bf16.mxu0 0
        %963 = vmatpush1.bf16.msra.mxu0 0
        %964 = vmatprep.subr.bf16.mxu0 0
        %965 = vmatpush1.bf16.msra.mxu0 0
        %966 = vmatprep.subr.bf16.mxu0 0
        %967 = vmatpush1.bf16.msra.mxu0 0
        %968 = vmatprep.subr.bf16.mxu0 0
        %969 = vmatpush1.bf16.msra.mxu0 0
        %970 = vmatprep.subr.bf16.mxu0 0
        %971 = vmatpush1.bf16.msra.mxu0 0
        %972 = vmatprep.subr.bf16.mxu0 0
        %973 = vmatpush1.bf16.msra.mxu0 0
        %974 = vmatprep.subr.bf16.mxu0 0
        %975 = vmatpush1.bf16.msra.mxu0 0
        %976 = vmatprep.subr.bf16.mxu0 0
        %977 = vmatpush1.bf16.msra.mxu0 0
        %978 = vmatprep.subr.bf16.mxu0 0
        %979 = vmatpush1.bf16.msra.mxu0 0
        %980 = vmatprep.subr.bf16.mxu0 0
        %981 = vmatpush1.bf16.msra.mxu0 0
        %982 = vmatprep.subr.bf16.mxu0 0
        %983 = vmatpush1.bf16.msra.mxu0 0
        %984 = vmatprep.mubr.bf16.mxu0 0
        %985 = vmatmul.mubr.bf16.gmra.mrb[0].mxu0 %v950
        %v986 = vpop.f32.mrb[0].mxu0
        %v987 = vadd.f32 0.0, %v986
        %v988 = vpop.f32.mrb[0].mxu0
        %v989 = vpop.f32.mrb[0].mxu0
        %v990 = vpop.f32.mrb[0].mxu0
        %991 = vdwg.mxu0
        %v992 = vld [vmem:[%s9] sm:$0xf]
        %v993 = vld [vmem:[%s9 + $0x4] sm:$0xf]
        %v994 = vld [vmem:[%s9 + $0x8] sm:$0xf]
        %v995 = vld [vmem:[%s9 + $0xc] sm:$0xf]
        %v996 = vpack.c.bf16 %v987, %v987
        %v998 = vsel %vm580, %v996, 0
        %v1001 = vsel %vm580, %v930, 0
        %1003 = vmatprep.subr.bf16.mxu0 0
        %1004 = vmatpush1.bf16.xpose.msra.mxu0 %v1001
        %1005 = vmatprep.subr.bf16.mxu0 0
        %1006 = vmatpush1.bf16.xpose.msra.mxu0 0
        %1007 = vmatprep.subr.bf16.mxu0 0
        %1008 = vmatpush1.bf16.xpose.msra.mxu0 0
        %1009 = vmatprep.subr.bf16.mxu0 0
        %1010 = vmatpush1.bf16.xpose.msra.mxu0 0
        %1011 = vmatprep.subr.bf16.mxu0 0
        %1012 = vmatpush1.bf16.xpose.msra.mxu0 0
        %1013 = vmatprep.subr.bf16.mxu0 0
        %1014 = vmatpush1.bf16.xpose.msra.mxu0 0
        %1015 = vmatprep.subr.bf16.mxu0 0
        %1016 = vmatpush1.bf16.xpose.msra.mxu0 0
        %1017 = vmatprep.subr.bf16.mxu0 0
        %1018 = vmatpush1.bf16.xpose.msra.mxu0 0
        %1019 = vmatprep.subr.bf16.mxu0 0
        %1020 = vmatpush1.bf16.xpose.msra.mxu0 0
        %1021 = vmatprep.subr.bf16.mxu0 0
        %1022 = vmatpush1.bf16.xpose.msra.mxu0 0
        %1023 = vmatprep.subr.bf16.mxu0 0
        %1024 = vmatpush1.bf16.xpose.msra.mxu0 0
        %1025 = vmatprep.subr.bf16.mxu0 0
        %1026 = vmatpush1.bf16.xpose.msra.mxu0 0
        %1027 = vmatprep.subr.bf16.mxu0 0
        %1028 = vmatpush1.bf16.xpose.msra.mxu0 0
        %1029 = vmatprep.subr.bf16.mxu0 0
        %1030 = vmatpush1.bf16.xpose.msra.mxu0 0
        %1031 = vmatprep.subr.bf16.mxu0 0
        %1032 = vmatpush1.bf16.xpose.msra.mxu0 0
        %1033 = vmatprep.subr.bf16.mxu0 0
        %1034 = vmatpush1.bf16.xpose.msra.mxu0 0
        %1035 = vmatprep.mubr.bf16.mxu0 0
        %1036 = vmatmul.mubr.bf16.gmra.mrb[0].mxu0 %v998
        %v1037 = vpop.f32.mrb[0].mxu0
        %v1038 = vadd.f32 0.0, %v1037
        %v1039 = vpop.f32.mrb[0].mxu0
        %v1040 = vpop.f32.mrb[0].mxu0
        %v1041 = vpop.f32.mrb[0].mxu0
        %1042 = vdwg.mxu0
        %v1043 = vmul.f32 %v1038, 0.17677669
        %v1044 = vadd.f32 %v1043, %v794
        %vm1045 = vcmask 129024
        %v1046 = vsel %vm1045, %v1044, -inf
        %1047 = vmax.xlane.f32.xlu0 %v1046
        %v1048 = vpop.xlane.xlu0 %1047
        %v1049 = vsub.f32 %v1044, %v1048
        %v1050 = vmul.f32 %v1049, 1.442695
        %v1051 = vpow.pop %v1050
        %v1052 = vsel %vm1045, %v1051, 0.0
        %1053 = vadd.xlane.f32.xlu0 %v1052
        %v1054 = vpop.xlane.xlu0 %1053
        %v1055 = vrcp.pop %v1054
        %v1056 = vmul.f32 %v1051, %v1055
        %v1057 = vpack.c.bf16 %v1056, %v1056
        %v1059 = vsel %vm798, %v1057, 0
        %1061 = vmatprep.subr.bf16.mxu0 0
        %1062 = vmatpush1.bf16.msra.mxu0 %v930
        %1063 = vmatprep.subr.bf16.mxu0 0
        %1064 = vmatpush1.bf16.msra.mxu0 0
        %1065 = vmatprep.subr.bf16.mxu0 0
        %1066 = vmatpush1.bf16.msra.mxu0 0
        %1067 = vmatprep.subr.bf16.mxu0 0
        %1068 = vmatpush1.bf16.msra.mxu0 0
        %1069 = vmatprep.subr.bf16.mxu0 0
        %1070 = vmatpush1.bf16.msra.mxu0 0
        %1071 = vmatprep.subr.bf16.mxu0 0
        %1072 = vmatpush1.bf16.msra.mxu0 0
        %1073 = vmatprep.subr.bf16.mxu0 0
        %1074 = vmatpush1.bf16.msra.mxu0 0
        %1075 = vmatprep.subr.bf16.mxu0 0
        %1076 = vmatpush1.bf16.msra.mxu0 0
        %1077 = vmatprep.subr.bf16.mxu0 0
        %1078 = vmatpush1.bf16.msra.mxu0 0
        %1079 = vmatprep.subr.bf16.mxu0 0
        %1080 = vmatpush1.bf16.msra.mxu0 0
        %1081 = vmatprep.subr.bf16.mxu0 0
        %1082 = vmatpush1.bf16.msra.mxu0 0
        %1083 = vmatprep.subr.bf16.mxu0 0
        %1084 = vmatpush1.bf16.msra.mxu0 0
        %1085 = vmatprep.subr.bf16.mxu0 0
        %1086 = vmatpush1.bf16.msra.mxu0 0
        %1087 = vmatprep.subr.bf16.mxu0 0
        %1088 = vmatpush1.bf16.msra.mxu0 0
        %1089 = vmatprep.subr.bf16.mxu0 0
        %1090 = vmatpush1.bf16.msra.mxu0 0
        %1091 = vmatprep.subr.bf16.mxu0 0
        %1092 = vmatpush1.bf16.msra.mxu0 0
        %1093 = vmatprep.mubr.bf16.mxu0 0
        %1094 = vmatmul.mubr.bf16.gmra.mrb[0].mxu0 %v1059
        %v1095 = vpop.f32.mrb[0].mxu0
        %v1096 = vadd.f32 0.0, %v1095
        %v1097 = vpop.f32.mrb[0].mxu0
        %v1098 = vpop.f32.mrb[0].mxu0
        %v1099 = vpop.f32.mrb[0].mxu0
        %1100 = vdwg.mxu0
        %v1101 = vpack.c.bf16 %v1096, %v1096
        %v1102 = vld [vmem:[#allocation8] sm:$0xf]
        %v1103 = vld [vmem:[#allocation8 + $0x4] sm:$0xf]
        %v1104 = vld [vmem:[#allocation8 + $0x8] sm:$0xf]
        %v1105 = vld [vmem:[#allocation8 + $0xc] sm:$0xf]
        %v1110 = vunpack.c.l.b16 %v1102
        %v1111 = vunpack.c.l.b16 %v1103
        %v1112 = vunpack.c.l.b16 %v1104
        %v1113 = vunpack.c.l.b16 %v1105
        %v1114 = vpack.c.b16 %v1111, %v1110
        %v1115 = vpack.c.b16 %v1113, %v1112
        %v1119 = vsel %vm580, %v1101, 0
        %1121 = vmatprep.subr.bf16.mxu0 0
        %1122 = vmatpush1.bf16.msra.mxu0 %v1114
        %1123 = vmatprep.subr.bf16.mxu0 0
        %1124 = vmatpush1.bf16.msra.mxu0 %v1115
        %1125 = vmatprep.subr.bf16.mxu0 0
        %1126 = vmatpush1.bf16.msra.mxu0 0
        %1127 = vmatprep.subr.bf16.mxu0 0
        %1128 = vmatpush1.bf16.msra.mxu0 0
        %1129 = vmatprep.subr.bf16.mxu0 0
        %1130 = vmatpush1.bf16.msra.mxu0 0
        %1131 = vmatprep.subr.bf16.mxu0 0
        %1132 = vmatpush1.bf16.msra.mxu0 0
        %1133 = vmatprep.subr.bf16.mxu0 0
        %1134 = vmatpush1.bf16.msra.mxu0 0
        %1135 = vmatprep.subr.bf16.mxu0 0
        %1136 = vmatpush1.bf16.msra.mxu0 0
        %1137 = vmatprep.subr.bf16.mxu0 0
        %1138 = vmatpush1.bf16.msra.mxu0 0
        %1139 = vmatprep.subr.bf16.mxu0 0
        %1140 = vmatpush1.bf16.msra.mxu0 0
        %1141 = vmatprep.subr.bf16.mxu0 0
        %1142 = vmatpush1.bf16.msra.mxu0 0
        %1143 = vmatprep.subr.bf16.mxu0 0
        %1144 = vmatpush1.bf16.msra.mxu0 0
        %1145 = vmatprep.subr.bf16.mxu0 0
        %1146 = vmatpush1.bf16.msra.mxu0 0
        %1147 = vmatprep.subr.bf16.mxu0 0
        %1148 = vmatpush1.bf16.msra.mxu0 0
        %1149 = vmatprep.subr.bf16.mxu0 0
        %1150 = vmatpush1.bf16.msra.mxu0 0
        %1151 = vmatprep.subr.bf16.mxu0 0
        %1152 = vmatpush1.bf16.msra.mxu0 0
        %1153 = vmatprep.mubr.bf16.mxu0 0
        %1154 = vmatmul.mubr.bf16.gmra.mrb[0].mxu0 %v1119
        %v1155 = vpop.f32.mrb[0].mxu0
        %v1156 = vadd.f32 0.0, %v1155
        %v1157 = vpop.f32.mrb[0].mxu0
        %v1158 = vpop.f32.mrb[0].mxu0
        %v1159 = vpop.f32.mrb[0].mxu0
        %1160 = vdwg.mxu0
        %v1165 = vunpack.c.l.b16 %v992
        %v1166 = vunpack.c.l.b16 %v993
        %v1167 = vunpack.c.l.b16 %v994
        %v1168 = vunpack.c.l.b16 %v995
        %v1169 = vpack.c.b16 %v1166, %v1165
        %v1170 = vpack.c.b16 %v1168, %v1167
        %1173 = vmatprep.subr.bf16.mxu0 0
        %1174 = vmatpush1.bf16.msra.mxu0 %v1169
        %1175 = vmatprep.subr.bf16.mxu0 0
        %1176 = vmatpush1.bf16.msra.mxu0 %v1170
        %1177 = vmatprep.subr.bf16.mxu0 0
        %1178 = vmatpush1.bf16.msra.mxu0 0
        %1179 = vmatprep.subr.bf16.mxu0 0
        %1180 = vmatpush1.bf16.msra.mxu0 0
        %1181 = vmatprep.subr.bf16.mxu0 0
        %1182 = vmatpush1.bf16.msra.mxu0 0
        %1183 = vmatprep.subr.bf16.mxu0 0
        %1184 = vmatpush1.bf16.msra.mxu0 0
        %1185 = vmatprep.subr.bf16.mxu0 0
        %1186 = vmatpush1.bf16.msra.mxu0 0
        %1187 = vmatprep.subr.bf16.mxu0 0
        %1188 = vmatpush1.bf16.msra.mxu0 0
        %1189 = vmatprep.subr.bf16.mxu0 0
        %1190 = vmatpush1.bf16.msra.mxu0 0
        %1191 = vmatprep.subr.bf16.mxu0 0
        %1192 = vmatpush1.bf16.msra.mxu0 0
        %1193 = vmatprep.subr.bf16.mxu0 0
        %1194 = vmatpush1.bf16.msra.mxu0 0
        %1195 = vmatprep.subr.bf16.mxu0 0
        %1196 = vmatpush1.bf16.msra.mxu0 0
        %1197 = vmatprep.subr.bf16.mxu0 0
        %1198 = vmatpush1.bf16.msra.mxu0 0
        %1199 = vmatprep.subr.bf16.mxu0 0
        %1200 = vmatpush1.bf16.msra.mxu0 0
        %1201 = vmatprep.subr.bf16.mxu0 0
        %1202 = vmatpush1.bf16.msra.mxu0 0
        %1203 = vmatprep.subr.bf16.mxu0 0
        %1204 = vmatpush1.bf16.msra.mxu0 0
        %1205 = vmatprep.mubr.bf16.mxu0 0
        %1206 = vmatmul.mubr.bf16.gmra.mrb[0].mxu0 %v950
        %v1207 = vpop.f32.mrb[0].mxu0
        %v1208 = vadd.f32 %v1156, %v1207
        %v1209 = vpop.f32.mrb[0].mxu0
        %v1210 = vpop.f32.mrb[0].mxu0
        %v1211 = vpop.f32.mrb[0].mxu0
        %1212 = vdwg.mxu0
        %v1213 = vtanh.pop %v1208
        %v1214 = vpack.c.bf16 %v1213, %v1213
        %v1215 = vld [vmem:[#allocation10] sm:$0xf]
        %v1216 = vld [vmem:[#allocation10 + $0x4] sm:$0xf]
        %v1217 = vld [vmem:[#allocation10 + $0x8] sm:$0xf]
        %v1218 = vld [vmem:[#allocation10 + $0xc] sm:$0xf]
        %v1219 = vld [vmem:[%s12] sm:$0x1]
        %v1221 = vlaneseq
        %v1222 = vshrl.u32 %v1221, 7
        %v1223 = vsub.s32 0, %v1222
        %v1224 = vrot.slane %v1219, %v1223
        %v1230 = vunpack.c.l.b16 %v1215
        %v1231 = vunpack.c.l.b16 %v1216
        %v1232 = vunpack.c.l.b16 %v1217
        %v1233 = vunpack.c.l.b16 %v1218
        %v1234 = vpack.c.b16 %v1231, %v1230
        %v1235 = vpack.c.b16 %v1233, %v1232
        %v1239 = vsel %vm580, %v1214, 0
        %1241 = vmatprep.subr.bf16.mxu0 0
        %1242 = vmatpush1.bf16.msra.mxu0 %v1234
        %1243 = vmatprep.subr.bf16.mxu0 0
        %1244 = vmatpush1.bf16.msra.mxu0 %v1235
        %1245 = vmatprep.subr.bf16.mxu0 0
        %1246 = vmatpush1.bf16.msra.mxu0 0
        %1247 = vmatprep.subr.bf16.mxu0 0
        %1248 = vmatpush1.bf16.msra.mxu0 0
        %1249 = vmatprep.subr.bf16.mxu0 0
        %1250 = vmatpush1.bf16.msra.mxu0 0
        %1251 = vmatprep.subr.bf16.mxu0 0
        %1252 = vmatpush1.bf16.msra.mxu0 0
        %1253 = vmatprep.subr.bf16.mxu0 0
        %1254 = vmatpush1.bf16.msra.mxu0 0
        %1255 = vmatprep.subr.bf16.mxu0 0
        %1256 = vmatpush1.bf16.msra.mxu0 0
        %1257 = vmatprep.subr.bf16.mxu0 0
        %1258 = vmatpush1.bf16.msra.mxu0 0
        %1259 = vmatprep.subr.bf16.mxu0 0
        %1260 = vmatpush1.bf16.msra.mxu0 0
        %1261 = vmatprep.subr.bf16.mxu0 0
        %1262 = vmatpush1.bf16.msra.mxu0 0
        %1263 = vmatprep.subr.bf16.mxu0 0
        %1264 = vmatpush1.bf16.msra.mxu0 0
        %1265 = vmatprep.subr.bf16.mxu0 0
        %1266 = vmatpush1.bf16.msra.mxu0 0
        %1267 = vmatprep.subr.bf16.mxu0 0
        %1268 = vmatpush1.bf16.msra.mxu0 0
        %1269 = vmatprep.subr.bf16.mxu0 0
        %1270 = vmatpush1.bf16.msra.mxu0 0
        %1271 = vmatprep.subr.bf16.mxu0 0
        %1272 = vmatpush1.bf16.msra.mxu0 0
        %1273 = vmatprep.mubr.bf16.mxu0 0
        %1274 = vmatmul.mubr.bf16.gmra.mrb[0].mxu0 %v1239
        %v1275 = vpop.f32.mrb[0].mxu0
        %v1276 = vadd.f32 %v1224, %v1275
        %v1277 = vpop.f32.mrb[0].mxu0
        %v1278 = vpop.f32.mrb[0].mxu0
        %v1279 = vpop.f32.mrb[0].mxu0
        %1280 = vdwg.mxu0
        %v1281 = vld [vmem:[%s558] sm:$0x7f]
        %vm1282 = vcmask 1046528
        %v1283 = vsel %vm1282, %v1276, -inf
        %1284 = vmax.xlane.f32.xlu0 %v1283
        %v1285 = vpop.xlane.xlu0 %1284
        %v1286 = vsub.f32 %v1276, %v1285
        %v1287 = vmul.f32 %v1286, 1.442695
        %v1288 = vpow.pop %v1287
        %v1289 = vsel %vm1282, %v1288, 0.0
        %1290 = vadd.xlane.f32.xlu0 %v1289
        %v1291 = vpop.xlane.xlu0 %1290
        %v1292 = vlog2.pop %v1291
        %v1293 = vmul.f32 %v1292, 0.6931472
        %v1294 = vadd.f32 %v1293, %v1285
        %v1295 = vlaneseq
        %v1296 = vand.u32 %v1295, 127
        %1297 = vset.pattern.permute.xlu0 0
        %1298 = vperm.xlu0 %1297, %v1281
        %v1299 = vpop.permute.xlu0 %1298
        %vm1300 = vcmp.eq.s32.totalorder %v1296, %v1299
        %v1301 = vsel %vm1300, %v1276, 0.0
        %v1302 = vsel %vm1282, %v1301, 0.0
        %1303 = vadd.xlane.f32.xlu0 %v1302
        %v1304 = vpop.xlane.xlu0 %1303
        %v1305 = vsub.f32 %v1294, %v1304
        %vm1306 = vcmp.ne.s32.totalorder %v1281, 4294967295
        %v1307 = vsel %vm1306, 1, 0
        %v1308 = vcvt.s32.f32 %v1307
        %vm1309 = vcmp.eq.f32.partialorder %v1276, %v1285
        %v1310 = vsel %vm1309, %v1296, 128
        %v1311 = vsel %vm1282, %v1310, 2147483647
        %v1312 = vand.u32 %v1311, 65535
        %v1313 = vshra.s32 %v1311, 16
        %v1314 = vcvt.s32.f32 %v1312
        %v1315 = vcvt.s32.f32 %v1313
        %1316 = vmin.xlane.f32.xlu0 %v1315
        %v1317 = vpop.xlane.xlu0 %1316
        %vm1318 = vcmp.eq.f32.partialorder %v1315, %v1317
        %v1319 = vsel %vm1318, %v1314, inf
        %1320 = vmin.xlane.f32.xlu0 %v1319
        %v1321 = vpop.xlane.xlu0 %1320
        %v1322 = vcvt.f32.s32 %v1321
        %v1323 = vcvt.f32.s32 %v1317
        %v1324 = vshll.u32 %v1323, 16
        %v1325 = vadd.s32 %v1324, %v1322
        %vm1326 = vcmp.eq.s32.totalorder %v1325, %v1281
        %v1327 = vsel %vm1326, 1, 0
        %v1328 = vcvt.s32.f32 %v1327
        %v1329 = vmul.f32 %v1328, %v1308
        %v1330 = vmul.f32 %v1305, %v1308
        %vm1331 = vcmask 6144
        %v1332 = vsel %vm1331, %v1330, 0.0
        %1333 = vadd.xlane.f32.xlu0 %v1332
        %v1334 = vpop.xlane.xlu0 %1333
        %v1335 = vrot.slane %v1334, 4
        %v1336 = vadd.f32 %v1334, %v1335
        %v1337 = vrot.slane %v1336, 2
        %v1338 = vadd.f32 %v1336, %v1337
        %v1339 = vrot.slane %v1338, 1
        %v1340 = vadd.f32 %v1338, %v1339
        %s1341 = vtos %v1340
        %v1342 = vsel %vm1331, %v1308, 0.0
        %1343 = vadd.xlane.f32.xlu0 %v1342
        %v1344 = vpop.xlane.xlu0 %1343
        %v1345 = vrot.slane %v1344, 4
        %v1346 = vadd.f32 %v1344, %v1345
        %v1347 = vrot.slane %v1346, 2
        %v1348 = vadd.f32 %v1346, %v1347
        %v1349 = vrot.slane %v1348, 1
        %v1350 = vadd.f32 %v1348, %v1349
        %s1351 = vtos %v1350
        %v1352 = vsel %vm1331, %v1329, 0.0
        %1353 = vadd.xlane.f32.xlu0 %v1352
        %v1354 = vpop.xlane.xlu0 %1353
        %v1355 = vrot.slane %v1354, 4
        %v1356 = vadd.f32 %v1354, %v1355
        %v1357 = vrot.slane %v1356, 2
        %v1358 = vadd.f32 %v1356, %v1357
        %v1359 = vrot.slane %v1358, 1
        %v1360 = vadd.f32 %v1358, %v1359
        %s1361 = vtos %v1360
        %v1362 = vsub.f32 %v1308, %v1329
        %v1363 = vsel %vm1331, %v1362, 0.0
        %v1364 = vrot.slane %v1363, 4
        %v1365 = vadd.f32 %v1363, %v1364
        %v1366 = vrot.slane %v1365, 2
        %v1367 = vadd.f32 %v1365, %v1366
        %v1368 = vrot.slane %v1367, 1
        %v1369 = vadd.f32 %v1367, %v1368
        %vm1370 = vcmp.eq.f32.partialorder %v1369, 0.0
        %v1371 = vsel %vm1370, 1, 0
        %v1372 = vcvt.s32.f32 %v1371
        %v1373 = vadd.f32 %v1372, 0.0
        %s1374 = vtos %v1373
        %vm1375 = vcmp.eq.s32.totalorder %v1296, 0
        %vm1376 = vcmp.eq.s32.totalorder %v1296, 1
        %vm1377 = vcmp.eq.s32.totalorder %v1296, 2
        %vm1378 = vcmp.eq.s32.totalorder %v1296, 3
        %v1379 = vstv %s1374
        %v1380 = vsel %vm1378, %v1379, 0.0
        %v1381 = vstv %s1361
        %v1382 = vsel %vm1377, %v1381, %v1380
        %v1383 = vstv %s1351
        %v1384 = vsel %vm1376, %v1383, %v1382
        %v1385 = vstv %s1341
        %v1386 = vsel %vm1375, %v1385, %v1384
        %1387 = vst [vmem:[%s542] sm:$0x1] %v1386
        %s1388 = sand.u32 %s331, 1
        %s1389 = scalar_lea.sflag [#allocation4], %s1388
        %s1390 = sand.u32 %s331, 1
        %s1391 = scalar_lea.vmem [#allocation11], %s1390
        // Predicated region
        $region93: #{tpu_custom_call.1} parent=71 // pred_check
          %p1392 = pneg %p341
        $region94: #{tpu_custom_call.1} parent=71 // pred_check_branch
          %1394 = sbr.rel (%p1392) target = $region96
        $region95: #{tpu_custom_call.1} parent=71 // pred_region
          %s1396 = ssub.s32 16, 16
          %1397 = vsyncadd %s1389, %s1396
          %s1398 = smul.addr %s30, 16
          %s1399 = scalar_lea.hbm %s13, %s1398
          %s1401 = sshll.u32 %s1391, 4
          %s1402 = int_to_ptr.vmem [resolvable:$true] %s1401
          %1404 = dma.vmem_to_hbm [thread:$0]  %s1402, 16, %s1399, %s1389
        $region96: #{tpu_custom_call.1} parent=71 // pred_fallthru
          _
      $region72: #{tpu_custom_call.1} parent=5 // pred_fallthru
        _
      %p1405 = scmp.le.s32.totalorder 2, %s25
      // Predicated region
      $region97: #{tpu_custom_call.1} parent=5 // pred_check
        %p1406 = pneg %p1405
      $region98: #{tpu_custom_call.1} parent=5 // pred_check_branch
        %1408 = sbr.rel (%p1406) target = $region100
      $region99: #{tpu_custom_call.1} parent=5 // pred_region
        %s1409 = ssub.s32 %s25, 2
        // Predicated region
        $region101: #{tpu_custom_call.1} parent=99 // pred_check
          %p1410 = pneg %p347
        $region102: #{tpu_custom_call.1} parent=99 // pred_check_branch
          %1412 = sbr.rel (%p1410) target = $region104
        $region103: #{tpu_custom_call.1} parent=99 // pred_region
          %s1413 = sand.u32 %s332, 1
          %s1414 = scalar_lea.sflag [#allocation4], %s1413
          %s1415 = sand.u32 %s332, 1
          %s1416 = scalar_lea.vmem [#allocation11], %s1415
          %1417 = dma.done %s1414, 16
        $region104: #{tpu_custom_call.1} parent=99 // pred_fallthru
          _
      $region100: #{tpu_custom_call.1} parent=5 // pred_fallthru
        _
    $region6: #{tpu_custom_call.1} parent=1 // loop_footer
      %s29 = sadd.s32 1, %s25
    $region7: #{tpu_custom_call.1} parent=1 // loop_footer_branch
      %24 = sbr.rel target = $region3
    $region8: #{tpu_custom_call.1} parent=1 // loop_exit
      _
    %1418 = vsyncpa [#allocation3], 1
    %s1419 = scalar_lea.sflag [#allocation3], 1
    %1420 = vsyncpa %s1419, 1
    %1421 = vsyncpa [#allocation6], 1
    %1422 = vsyncpa [#allocation9], 1
    %1423 = vsyncpa [#allocation4], 1
    %s1424 = scalar_lea.sflag [#allocation4], 1
    %1425 = vsyncpa %s1424, 1

</llo_original>
